<compile_context>
chip_gen: v7x
topology: tpu7x:2x2x1
jax: 0.10.0
libtpu: 0.0.40
codegen_flags: <defaults>
</compile_context>

<pallas_src>
import functools

import jax
import jax.numpy as jnp
from jax import lax
from jax.experimental import pallas as pl
from jax.experimental.pallas import tpu as pltpu


def _lane_shift(x, delta):
    """shifted[:, m] = x[:, m + delta] if 0 <= m + delta < HW else 0."""
    cin, hw = x.shape
    if delta == 0:
        return x
    zeros = jnp.zeros((cin, abs(delta)), x.dtype)
    if delta > 0:
        return jnp.concatenate([x[:, delta:], zeros], axis=1)
    return jnp.concatenate([zeros, x[:, :hw + delta]], axis=1)


def _make_kernel(shifts):
    """Build the per-batch-element subpixel-conv kernel.

    shifts: static flat lane offsets (dh*W + dw) of the Kd*Kd effective taps.
    """
    def kernel(x_ref, w_ref, m_ref, b_ref, o_ref):
        # x_ref: (1, Cin, HW)   original image, channels on sublanes, flat HW on lanes
        # w_ref: (T,  Cq, Cin)  folded sub-pixel weights, T = Kd*Kd, Cq = s*s*Cout
        # m_ref: (T,  1,  HW)   border-validity masks (0/1) per tap
        # b_ref: (Cq, 1)        bias per sub-pixel channel
        # o_ref: (1,  Cq, HW)   lane-dense output
        cq = w_ref.shape[1]
        hw = x_ref.shape[2]
        x = x_ref[0]                                     # (Cin, HW)
        acc = jnp.zeros((cq, hw), jnp.float32)           # 8 vregs, stays in regs
        for t, delta in enumerate(shifts):               # static unroll, Kd*Kd taps
            window = _lane_shift(x, delta) * m_ref[t]    # (Cin, HW), zero borders
            acc += jnp.dot(w_ref[t], window,             # (Cq,Cin) x (Cin,HW) on MXU
                           preferred_element_type=jnp.float32)
        acc += b_ref[...].astype(jnp.float32)            # lane-broadcast bias
        o_ref[...] = acc.reshape(1, cq, hw).astype(o_ref.dtype)
    return kernel


def _fold_upsample_into_weight(weight_oihw, s):
    """Fold the x-s nearest upsample into the conv weights (subpixel conv).

    Returns (w_eff, offsets):
      w_eff  : (T, Cout*s*s, Cin)  effective weights on the ORIGINAL grid,
               sub-pixel channel index cq = co*s*s + r*s + c
      offsets: list of T (dh, dw) integer tap offsets on the original grid
    """
    Cout, Cin, K, _ = weight_oihw.shape
    p = (K - 1) // 2
    d_min = -((p + s - 1) // s)        # floor(-p / s)
    d_max = (s - 1 + p) // s           # floor((s - 1 + p) / s)
    taps, offsets = [], []
    for dh in range(d_min, d_max + 1):
        for dw in range(d_min, d_max + 1):
            per_rc = []
            for r in range(s):
                for c in range(s):
                    khs = [kh for kh in range(K) if (r + kh - p) // s == dh]
                    kws = [kw for kw in range(K) if (c + kw - p) // s == dw]
                    if khs and kws:
                        blk = sum(weight_oihw[:, :, kh, kw]
                                  for kh in khs for kw in kws)   # (Cout, Cin)
                    else:
                        blk = jnp.zeros((Cout, Cin), weight_oihw.dtype)
                    per_rc.append(blk)
            w_tap = jnp.stack(per_rc, axis=0).transpose(1, 0, 2)  # (Cout, s*s, Cin)
            taps.append(w_tap.reshape(Cout * s * s, Cin))
            offsets.append((dh, dw))
    return jnp.stack(taps, axis=0), offsets


@functools.partial(jax.jit, static_argnums=(3,))
def resize_conv(x_nchw, weight_oihw, bias, scale_factor):
    """x_nchw: (N, Cin, H, W); weight_oihw: (Cout, Cin, K, K); bias: (Cout,)."""
    N, Cin, H, W = x_nchw.shape
    Cout, _, K, Kw = weight_oihw.shape
    assert K == Kw and K % 2 == 1, "odd kernel assumed for symmetric 'same' pad"
    s = int(scale_factor)
    HW = H * W
    Cq = Cout * s * s

    # --- glue: fold upsample into weights; build static tap shifts + masks
    w_eff, offsets = _fold_upsample_into_weight(weight_oihw, s)   # (T, Cq, Cin)
    T = len(offsets)
    b_q = jnp.repeat(bias, s * s).reshape(Cq, 1)                  # (Cq, 1)

    ii = jnp.arange(H).reshape(H, 1)
    jj = jnp.arange(W).reshape(1, W)
    masks, shifts = [], []
    for dh, dw in offsets:
        valid = ((ii + dh >= 0) & (ii + dh < H) &
                 (jj + dw >= 0) & (jj + dw < W))
        masks.append(valid.reshape(1, HW))
        shifts.append(dh * W + dw)
    mask_arr = jnp.stack(masks, axis=0).astype(x_nchw.dtype)      # (T, 1, HW)

    x_flat = x_nchw.reshape(N, Cin, HW)   # NCHW flattens straight to (C, HW)

    z = pl.pallas_call(
        _make_kernel(tuple(shifts)),
        out_shape=jax.ShapeDtypeStruct((N, Cq, HW), x_nchw.dtype),
        grid_spec=pltpu.PrefetchScalarGridSpec(
            num_scalar_prefetch=0,
            grid=(N,),
            in_specs=[
                pl.BlockSpec((1, Cin, HW), lambda n: (n, 0, 0)),
                pl.BlockSpec((T, Cq, Cin), lambda n: (0, 0, 0)),   # resident
                pl.BlockSpec((T, 1, HW), lambda n: (0, 0, 0)),     # resident
                pl.BlockSpec((Cq, 1), lambda n: (0, 0)),           # resident
            ],
            out_specs=pl.BlockSpec((1, Cq, HW), lambda n: (n, 0, 0)),
        ),
        compiler_params=pltpu.CompilerParams(
            dimension_semantics=("parallel",)),
    )(x_flat, w_eff, mask_arr, b_q)

    # --- glue: depth-to-space (N, Cout*s*s, H*W) -> (N, Cout, H*s, W*s)
    z = z.reshape(N, Cout, s, s, H, W)
    z = jnp.transpose(z, (0, 1, 4, 2, 5, 3))
    return z.reshape(N, Cout, H * s, W * s)


def _reference(x_nchw, weight_oihw, bias, scale_factor):
    s = int(scale_factor)
    y = jnp.repeat(jnp.repeat(x_nchw, s, axis=2), s, axis=3)
    out = lax.conv_general_dilated(
        y, weight_oihw, window_strides=(1, 1), padding="SAME",
        dimension_numbers=("NCHW", "OIHW", "NCHW"))
    return out + bias.reshape(1, -1, 1, 1)


if __name__ == "__main__":
    # Module config (dim=2): input_channels=4, output_channels=8,
    # kernel_size=3, scale_factor=2, bias=True, mode='nearest'.
    N, Cin, H, W = 2, 4, 16, 16
    Cout, K, scale = 8, 3, 2

    key = jax.random.PRNGKey(0)
    kx, kw, kb = jax.random.split(key, 3)
    x = jax.random.normal(kx, (N, Cin, H, W), dtype=jnp.float32)
    # Deterministic synthetic parameters (Conv2d-shaped: (Cout, Cin, K, K))
    fan_in = Cin * K * K
    bound = 1.0 / (fan_in ** 0.5)
    weight = jax.random.uniform(kw, (Cout, Cin, K, K), jnp.float32,
                                minval=-bound, maxval=bound)
    bias = jax.random.uniform(kb, (Cout,), jnp.float32,
                              minval=-bound, maxval=bound)

    out = resize_conv(x, weight, bias, scale)
    out = jax.block_until_ready(out)

    ref = jax.block_until_ready(_reference(x, weight, bias, scale))
    assert out.shape == (N, Cout, H * scale, W * scale), out.shape
    assert jnp.allclose(out, ref, atol=1e-4, rtol=1e-4), \
        float(jnp.max(jnp.abs(out - ref)))

    print("KERNEL_OK")
</pallas_src>

<mosaic_0001>
module attributes {stable_mosaic.version = 11 : i64} {
  func.func @kernel(%arg0: i32, %arg1: memref<1x4x256xf32, #tpu.memory_space<vmem>>, %arg2: memref<9x32x4xf32, #tpu.memory_space<vmem>>, %arg3: memref<9x1x256xf32, #tpu.memory_space<vmem>>, %arg4: memref<32x1xf32, #tpu.memory_space<vmem>>, %arg5: memref<1x32x256xf32, #tpu.memory_space<vmem>>) attributes {dimension_semantics = [#tpu.dimension_semantics<parallel>], iteration_bounds = array<i64: 2>, scalar_prefetch = 0 : i64, scratch_operands = 0 : i64, tpu.core_type = #tpu.core_type<tc>, window_params = [{transform_indices = @transform_0, window_bounds = array<i64: 1, 4, 256>}, {pipeline_mode = #tpu.pipeline_mode<synchronous>, transform_indices = @transform_1, window_bounds = array<i64: 9, 32, 4>}, {pipeline_mode = #tpu.pipeline_mode<synchronous>, transform_indices = @transform_2, window_bounds = array<i64: 9, 1, 256>}, {pipeline_mode = #tpu.pipeline_mode<synchronous>, transform_indices = @transform_3, window_bounds = array<i64: 32, 1>}, {transform_indices = @transform_4, window_bounds = array<i64: 1, 32, 256>}]} {
    %c0 = arith.constant 0 : index
    %c0_0 = arith.constant 0 : index
    %c0_1 = arith.constant 0 : index
    %0 = vector.load %arg1[%c0, %c0_0, %c0_1] : memref<1x4x256xf32, #tpu.memory_space<vmem>>, vector<1x4x256xf32>
    %1 = vector.shape_cast %0 : vector<1x4x256xf32> to vector<4x256xf32>
    %cst = arith.constant 0.000000e+00 : f32
    %2 = vector.broadcast %cst : f32 to vector<32x256xf32>
    %cst_2 = arith.constant 0.000000e+00 : f32
    %3 = vector.broadcast %cst_2 : f32 to vector<4x17xf32>
    %4 = vector.extract_strided_slice %1 {offsets = [0, 0], sizes = [4, 239], strides = [1, 1]} : vector<4x256xf32> to vector<4x239xf32>
    %5 = tpu.concatenate %3, %4 in 1 : vector<4x17xf32>, vector<4x239xf32> -> vector<4x256xf32>
    %c0_3 = arith.constant 0 : index
    %c0_4 = arith.constant 0 : index
    %c0_5 = arith.constant 0 : index
    %6 = vector.load %arg3[%c0_3, %c0_4, %c0_5] : memref<9x1x256xf32, #tpu.memory_space<vmem>>, vector<1x1x256xf32>
    %7 = vector.shape_cast %6 : vector<1x1x256xf32> to vector<1x256xf32>
    %8 = vector.broadcast %7 : vector<1x256xf32> to vector<4x256xf32>
    %9 = arith.mulf %5, %8 : vector<4x256xf32>
    %c0_6 = arith.constant 0 : index
    %c0_7 = arith.constant 0 : index
    %c0_8 = arith.constant 0 : index
    %10 = vector.load %arg2[%c0_6, %c0_7, %c0_8] : memref<9x32x4xf32, #tpu.memory_space<vmem>>, vector<1x32x4xf32>
    %11 = vector.shape_cast %10 : vector<1x32x4xf32> to vector<32x4xf32>
    %cst_9 = arith.constant dense<0.000000e+00> : vector<32x256xf32>
    %12 = tpu.matmul %11, %9, %cst_9 {dimension_numbers = #tpu.dot_dimension_numbers<[1], [0], [0], [1], [0, 0, 1, 1], [], []>} : vector<32x4xf32>, vector<4x256xf32>, vector<32x256xf32> -> vector<32x256xf32>
    %13 = arith.addf %2, %12 : vector<32x256xf32>
    %cst_10 = arith.constant 0.000000e+00 : f32
    %14 = vector.broadcast %cst_10 : f32 to vector<4x16xf32>
    %15 = vector.extract_strided_slice %1 {offsets = [0, 0], sizes = [4, 240], strides = [1, 1]} : vector<4x256xf32> to vector<4x240xf32>
    %16 = tpu.concatenate %14, %15 in 1 : vector<4x16xf32>, vector<4x240xf32> -> vector<4x256xf32>
    %c1 = arith.constant 1 : index
    %c0_11 = arith.constant 0 : index
    %c0_12 = arith.constant 0 : index
    %17 = vector.load %arg3[%c1, %c0_11, %c0_12] : memref<9x1x256xf32, #tpu.memory_space<vmem>>, vector<1x1x256xf32>
    %18 = vector.shape_cast %17 : vector<1x1x256xf32> to vector<1x256xf32>
    %19 = vector.broadcast %18 : vector<1x256xf32> to vector<4x256xf32>
    %20 = arith.mulf %16, %19 : vector<4x256xf32>
    %c1_13 = arith.constant 1 : index
    %c0_14 = arith.constant 0 : index
    %c0_15 = arith.constant 0 : index
    %21 = vector.load %arg2[%c1_13, %c0_14, %c0_15] : memref<9x32x4xf32, #tpu.memory_space<vmem>>, vector<1x32x4xf32>
    %22 = vector.shape_cast %21 : vector<1x32x4xf32> to vector<32x4xf32>
    %cst_16 = arith.constant dense<0.000000e+00> : vector<32x256xf32>
    %23 = tpu.matmul %22, %20, %cst_16 {dimension_numbers = #tpu.dot_dimension_numbers<[1], [0], [0], [1], [0, 0, 1, 1], [], []>} : vector<32x4xf32>, vector<4x256xf32>, vector<32x256xf32> -> vector<32x256xf32>
    %24 = arith.addf %13, %23 : vector<32x256xf32>
    %cst_17 = arith.constant 0.000000e+00 : f32
    %25 = vector.broadcast %cst_17 : f32 to vector<4x15xf32>
    %26 = vector.extract_strided_slice %1 {offsets = [0, 0], sizes = [4, 241], strides = [1, 1]} : vector<4x256xf32> to vector<4x241xf32>
    %27 = tpu.concatenate %25, %26 in 1 : vector<4x15xf32>, vector<4x241xf32> -> vector<4x256xf32>
    %c2 = arith.constant 2 : index
    %c0_18 = arith.constant 0 : index
    %c0_19 = arith.constant 0 : index
    %28 = vector.load %arg3[%c2, %c0_18, %c0_19] : memref<9x1x256xf32, #tpu.memory_space<vmem>>, vector<1x1x256xf32>
    %29 = vector.shape_cast %28 : vector<1x1x256xf32> to vector<1x256xf32>
    %30 = vector.broadcast %29 : vector<1x256xf32> to vector<4x256xf32>
    %31 = arith.mulf %27, %30 : vector<4x256xf32>
    %c2_20 = arith.constant 2 : index
    %c0_21 = arith.constant 0 : index
    %c0_22 = arith.constant 0 : index
    %32 = vector.load %arg2[%c2_20, %c0_21, %c0_22] : memref<9x32x4xf32, #tpu.memory_space<vmem>>, vector<1x32x4xf32>
    %33 = vector.shape_cast %32 : vector<1x32x4xf32> to vector<32x4xf32>
    %cst_23 = arith.constant dense<0.000000e+00> : vector<32x256xf32>
    %34 = tpu.matmul %33, %31, %cst_23 {dimension_numbers = #tpu.dot_dimension_numbers<[1], [0], [0], [1], [0, 0, 1, 1], [], []>} : vector<32x4xf32>, vector<4x256xf32>, vector<32x256xf32> -> vector<32x256xf32>
    %35 = arith.addf %24, %34 : vector<32x256xf32>
    %cst_24 = arith.constant 0.000000e+00 : f32
    %36 = vector.broadcast %cst_24 : f32 to vector<4x1xf32>
    %37 = vector.extract_strided_slice %1 {offsets = [0, 0], sizes = [4, 255], strides = [1, 1]} : vector<4x256xf32> to vector<4x255xf32>
    %38 = tpu.concatenate %36, %37 in 1 : vector<4x1xf32>, vector<4x255xf32> -> vector<4x256xf32>
    %c3 = arith.constant 3 : index
    %c0_25 = arith.constant 0 : index
    %c0_26 = arith.constant 0 : index
    %39 = vector.load %arg3[%c3, %c0_25, %c0_26] : memref<9x1x256xf32, #tpu.memory_space<vmem>>, vector<1x1x256xf32>
    %40 = vector.shape_cast %39 : vector<1x1x256xf32> to vector<1x256xf32>
    %41 = vector.broadcast %40 : vector<1x256xf32> to vector<4x256xf32>
    %42 = arith.mulf %38, %41 : vector<4x256xf32>
    %c3_27 = arith.constant 3 : index
    %c0_28 = arith.constant 0 : index
    %c0_29 = arith.constant 0 : index
    %43 = vector.load %arg2[%c3_27, %c0_28, %c0_29] : memref<9x32x4xf32, #tpu.memory_space<vmem>>, vector<1x32x4xf32>
    %44 = vector.shape_cast %43 : vector<1x32x4xf32> to vector<32x4xf32>
    %cst_30 = arith.constant dense<0.000000e+00> : vector<32x256xf32>
    %45 = tpu.matmul %44, %42, %cst_30 {dimension_numbers = #tpu.dot_dimension_numbers<[1], [0], [0], [1], [0, 0, 1, 1], [], []>} : vector<32x4xf32>, vector<4x256xf32>, vector<32x256xf32> -> vector<32x256xf32>
    %46 = arith.addf %35, %45 : vector<32x256xf32>
    %c4 = arith.constant 4 : index
    %c0_31 = arith.constant 0 : index
    %c0_32 = arith.constant 0 : index
    %47 = vector.load %arg3[%c4, %c0_31, %c0_32] : memref<9x1x256xf32, #tpu.memory_space<vmem>>, vector<1x1x256xf32>
    %48 = vector.shape_cast %47 : vector<1x1x256xf32> to vector<1x256xf32>
    %49 = vector.broadcast %48 : vector<1x256xf32> to vector<4x256xf32>
    %50 = arith.mulf %1, %49 : vector<4x256xf32>
    %c4_33 = arith.constant 4 : index
    %c0_34 = arith.constant 0 : index
    %c0_35 = arith.constant 0 : index
    %51 = vector.load %arg2[%c4_33, %c0_34, %c0_35] : memref<9x32x4xf32, #tpu.memory_space<vmem>>, vector<1x32x4xf32>
    %52 = vector.shape_cast %51 : vector<1x32x4xf32> to vector<32x4xf32>
    %cst_36 = arith.constant dense<0.000000e+00> : vector<32x256xf32>
    %53 = tpu.matmul %52, %50, %cst_36 {dimension_numbers = #tpu.dot_dimension_numbers<[1], [0], [0], [1], [0, 0, 1, 1], [], []>} : vector<32x4xf32>, vector<4x256xf32>, vector<32x256xf32> -> vector<32x256xf32>
    %54 = arith.addf %46, %53 : vector<32x256xf32>
    %cst_37 = arith.constant 0.000000e+00 : f32
    %55 = vector.broadcast %cst_37 : f32 to vector<4x1xf32>
    %56 = vector.extract_strided_slice %1 {offsets = [0, 1], sizes = [4, 255], strides = [1, 1]} : vector<4x256xf32> to vector<4x255xf32>
    %57 = tpu.concatenate %56, %55 in 1 : vector<4x255xf32>, vector<4x1xf32> -> vector<4x256xf32>
    %c5 = arith.constant 5 : index
    %c0_38 = arith.constant 0 : index
    %c0_39 = arith.constant 0 : index
    %58 = vector.load %arg3[%c5, %c0_38, %c0_39] : memref<9x1x256xf32, #tpu.memory_space<vmem>>, vector<1x1x256xf32>
    %59 = vector.shape_cast %58 : vector<1x1x256xf32> to vector<1x256xf32>
    %60 = vector.broadcast %59 : vector<1x256xf32> to vector<4x256xf32>
    %61 = arith.mulf %57, %60 : vector<4x256xf32>
    %c5_40 = arith.constant 5 : index
    %c0_41 = arith.constant 0 : index
    %c0_42 = arith.constant 0 : index
    %62 = vector.load %arg2[%c5_40, %c0_41, %c0_42] : memref<9x32x4xf32, #tpu.memory_space<vmem>>, vector<1x32x4xf32>
    %63 = vector.shape_cast %62 : vector<1x32x4xf32> to vector<32x4xf32>
    %cst_43 = arith.constant dense<0.000000e+00> : vector<32x256xf32>
    %64 = tpu.matmul %63, %61, %cst_43 {dimension_numbers = #tpu.dot_dimension_numbers<[1], [0], [0], [1], [0, 0, 1, 1], [], []>} : vector<32x4xf32>, vector<4x256xf32>, vector<32x256xf32> -> vector<32x256xf32>
    %65 = arith.addf %54, %64 : vector<32x256xf32>
    %cst_44 = arith.constant 0.000000e+00 : f32
    %66 = vector.broadcast %cst_44 : f32 to vector<4x15xf32>
    %67 = vector.extract_strided_slice %1 {offsets = [0, 15], sizes = [4, 241], strides = [1, 1]} : vector<4x256xf32> to vector<4x241xf32>
    %68 = tpu.concatenate %67, %66 in 1 : vector<4x241xf32>, vector<4x15xf32> -> vector<4x256xf32>
    %c6 = arith.constant 6 : index
    %c0_45 = arith.constant 0 : index
    %c0_46 = arith.constant 0 : index
    %69 = vector.load %arg3[%c6, %c0_45, %c0_46] : memref<9x1x256xf32, #tpu.memory_space<vmem>>, vector<1x1x256xf32>
    %70 = vector.shape_cast %69 : vector<1x1x256xf32> to vector<1x256xf32>
    %71 = vector.broadcast %70 : vector<1x256xf32> to vector<4x256xf32>
    %72 = arith.mulf %68, %71 : vector<4x256xf32>
    %c6_47 = arith.constant 6 : index
    %c0_48 = arith.constant 0 : index
    %c0_49 = arith.constant 0 : index
    %73 = vector.load %arg2[%c6_47, %c0_48, %c0_49] : memref<9x32x4xf32, #tpu.memory_space<vmem>>, vector<1x32x4xf32>
    %74 = vector.shape_cast %73 : vector<1x32x4xf32> to vector<32x4xf32>
    %cst_50 = arith.constant dense<0.000000e+00> : vector<32x256xf32>
    %75 = tpu.matmul %74, %72, %cst_50 {dimension_numbers = #tpu.dot_dimension_numbers<[1], [0], [0], [1], [0, 0, 1, 1], [], []>} : vector<32x4xf32>, vector<4x256xf32>, vector<32x256xf32> -> vector<32x256xf32>
    %76 = arith.addf %65, %75 : vector<32x256xf32>
    %cst_51 = arith.constant 0.000000e+00 : f32
    %77 = vector.broadcast %cst_51 : f32 to vector<4x16xf32>
    %78 = vector.extract_strided_slice %1 {offsets = [0, 16], sizes = [4, 240], strides = [1, 1]} : vector<4x256xf32> to vector<4x240xf32>
    %79 = tpu.concatenate %78, %77 in 1 : vector<4x240xf32>, vector<4x16xf32> -> vector<4x256xf32>
    %c7 = arith.constant 7 : index
    %c0_52 = arith.constant 0 : index
    %c0_53 = arith.constant 0 : index
    %80 = vector.load %arg3[%c7, %c0_52, %c0_53] : memref<9x1x256xf32, #tpu.memory_space<vmem>>, vector<1x1x256xf32>
    %81 = vector.shape_cast %80 : vector<1x1x256xf32> to vector<1x256xf32>
    %82 = vector.broadcast %81 : vector<1x256xf32> to vector<4x256xf32>
    %83 = arith.mulf %79, %82 : vector<4x256xf32>
    %c7_54 = arith.constant 7 : index
    %c0_55 = arith.constant 0 : index
    %c0_56 = arith.constant 0 : index
    %84 = vector.load %arg2[%c7_54, %c0_55, %c0_56] : memref<9x32x4xf32, #tpu.memory_space<vmem>>, vector<1x32x4xf32>
    %85 = vector.shape_cast %84 : vector<1x32x4xf32> to vector<32x4xf32>
    %cst_57 = arith.constant dense<0.000000e+00> : vector<32x256xf32>
    %86 = tpu.matmul %85, %83, %cst_57 {dimension_numbers = #tpu.dot_dimension_numbers<[1], [0], [0], [1], [0, 0, 1, 1], [], []>} : vector<32x4xf32>, vector<4x256xf32>, vector<32x256xf32> -> vector<32x256xf32>
    %87 = arith.addf %76, %86 : vector<32x256xf32>
    %cst_58 = arith.constant 0.000000e+00 : f32
    %88 = vector.broadcast %cst_58 : f32 to vector<4x17xf32>
    %89 = vector.extract_strided_slice %1 {offsets = [0, 17], sizes = [4, 239], strides = [1, 1]} : vector<4x256xf32> to vector<4x239xf32>
    %90 = tpu.concatenate %89, %88 in 1 : vector<4x239xf32>, vector<4x17xf32> -> vector<4x256xf32>
    %c8 = arith.constant 8 : index
    %c0_59 = arith.constant 0 : index
    %c0_60 = arith.constant 0 : index
    %91 = vector.load %arg3[%c8, %c0_59, %c0_60] : memref<9x1x256xf32, #tpu.memory_space<vmem>>, vector<1x1x256xf32>
    %92 = vector.shape_cast %91 : vector<1x1x256xf32> to vector<1x256xf32>
    %93 = vector.broadcast %92 : vector<1x256xf32> to vector<4x256xf32>
    %94 = arith.mulf %90, %93 : vector<4x256xf32>
    %c8_61 = arith.constant 8 : index
    %c0_62 = arith.constant 0 : index
    %c0_63 = arith.constant 0 : index
    %95 = vector.load %arg2[%c8_61, %c0_62, %c0_63] : memref<9x32x4xf32, #tpu.memory_space<vmem>>, vector<1x32x4xf32>
    %96 = vector.shape_cast %95 : vector<1x32x4xf32> to vector<32x4xf32>
    %cst_64 = arith.constant dense<0.000000e+00> : vector<32x256xf32>
    %97 = tpu.matmul %96, %94, %cst_64 {dimension_numbers = #tpu.dot_dimension_numbers<[1], [0], [0], [1], [0, 0, 1, 1], [], []>} : vector<32x4xf32>, vector<4x256xf32>, vector<32x256xf32> -> vector<32x256xf32>
    %98 = arith.addf %87, %97 : vector<32x256xf32>
    %c0_65 = arith.constant 0 : index
    %c0_66 = arith.constant 0 : index
    %99 = vector.load %arg4[%c0_65, %c0_66] : memref<32x1xf32, #tpu.memory_space<vmem>>, vector<32x1xf32>
    %100 = vector.broadcast %99 : vector<32x1xf32> to vector<32x256xf32>
    %101 = arith.addf %98, %100 : vector<32x256xf32>
    %102 = vector.shape_cast %101 : vector<32x256xf32> to vector<1x32x256xf32>
    %c0_67 = arith.constant 0 : index
    %c0_68 = arith.constant 0 : index
    %c0_69 = arith.constant 0 : index
    %103 = vector.load %arg5[%c0_67, %c0_68, %c0_69] : memref<1x32x256xf32, #tpu.memory_space<vmem>>, vector<1x32x256xf32>
    tpu.vector_store %arg5[%c0_67, %c0_68, %c0_69], %102 {strides = array<i32>} : memref<1x32x256xf32, #tpu.memory_space<vmem>>, vector<1x32x256xf32>,
    return
  }
  func.func @transform_0(%arg0: i32) -> (i32, i32, i32) {
    %c0_i32 = arith.constant 0 : i32
    %c0_i32_0 = arith.constant 0 : i32
    %c0_i32_1 = arith.constant 0 : i32
    return %arg0, %c0_i32, %c0_i32_0 : i32, i32, i32
  }
  func.func @transform_1(%arg0: i32) -> (i32, i32, i32) {
    %c0_i32 = arith.constant 0 : i32
    %c0_i32_0 = arith.constant 0 : i32
    %c0_i32_1 = arith.constant 0 : i32
    %c0_i32_2 = arith.constant 0 : i32
    return %c0_i32, %c0_i32_0, %c0_i32_1 : i32, i32, i32
  }
  func.func @transform_2(%arg0: i32) -> (i32, i32, i32) {
    %c0_i32 = arith.constant 0 : i32
    %c0_i32_0 = arith.constant 0 : i32
    %c0_i32_1 = arith.constant 0 : i32
    %c0_i32_2 = arith.constant 0 : i32
    return %c0_i32, %c0_i32_0, %c0_i32_1 : i32, i32, i32
  }
  func.func @transform_3(%arg0: i32) -> (i32, i32) {
    %c0_i32 = arith.constant 0 : i32
    %c0_i32_0 = arith.constant 0 : i32
    %c0_i32_1 = arith.constant 0 : i32
    return %c0_i32, %c0_i32_0 : i32, i32
  }
  func.func @transform_4(%arg0: i32) -> (i32, i32, i32) {
    %c0_i32 = arith.constant 0 : i32
    %c0_i32_0 = arith.constant 0 : i32
    %c0_i32_1 = arith.constant 0 : i32
    return %arg0, %c0_i32, %c0_i32_0 : i32, i32, i32
  }
}

</mosaic_0001>

<llo_original>
// kernel: resize_conv.1
$region0: #{resize_conv.1}
  #allocation0 [shape = 'u32[]', space=smem, size = 0x4, offset = 0x4, fixed_abs, tag = 'smem constant byte address 0x4 - core index']
  #allocation1 [shape = 'u32[144,128]{1,0:T(1,128)}', space=vmem, size = 0x12000, scoped, tag = 'internal scratch']
  %s0 = inlined_call_operand.vmem [shape: f32[2,4,256], index: 0, kind: input, shape index: {}]
  %s1 = inlined_call_operand.vmem [shape: f32[9,32,4], index: 1, kind: input, shape index: {}]
  %s2 = inlined_call_operand.vmem [shape: f32[9,1,256], index: 2, kind: input, shape index: {}]
  %s3 = inlined_call_operand.vmem [shape: f32[32,1], index: 3, kind: input, shape index: {}]
  %s4 = inlined_call_operand.vmem [shape: f32[2,32,256], index: 4, kind: output, shape index: {}]
  %s5 = sld [smem:[#allocation0]]
  $region49: #{resize_conv.1} parent=0
    _
  %s7 = ssub.s32 1, %s5
  %s8 = scalar_select 0, %s7, %s5
  loop: start=0, step=1, limit=4
  $region2: #{resize_conv.1} parent=0 // loop_pre_header
    _
  $region3: #{resize_conv.1} parent=0 // loop_header
    %s10 = sphi 0, %s14
    %p11 = scmp.ge.s32.totalorder %s10, 4
    %s20 = sphi 0, %s22
    %s23 = sphi 0, %s20
    %s24 = sphi 0, %s23
    %s40 = sphi 0, %s24
    %s44 = sphi 0, %s44
    %s46 = sphi 0, %s44
    %s47 = sphi 0, %s46
    %s61 = sphi 0, %s47
    %s65 = sphi 0, %s65
    %s67 = sphi 0, %s65
    %s68 = sphi 0, %s67
    %s82 = sphi 0, %s68
    %s86 = sphi 0, %s86
    %s88 = sphi 0, %s86
    %s89 = sphi 0, %s88
    %s103 = sphi 0, %s89
    %s109 = sphi 0, %s111
    %s112 = sphi 0, %s109
    %s113 = sphi 0, %s112
    %s129 = sphi 0, %s113
  $region4: #{resize_conv.1} parent=0 // loop_header_branch
    %13 = sbr.rel (%p11) target = $region8
  $region5: #{resize_conv.1} parent=0 // loop_body
    %s15 = ssub.s32 %s10, 1
    %s16 = ssub.s32 %s10, 2
    %s17 = sadd.s32 %s10, 1
    %s18 = ssub.s32 %s10, %s17
    %p19 = scmp.eq.s32.totalorder %s18, 0
    %s21 = sadd.s32 %s20, 1
    %s22 = scalar_select %p19, %s20, %s21
    %p25 = pneg %p19
    %p26 = scmp.eq.s32.totalorder %s10, 1
    %p27 = por %p25, %p26
    %p28 = scmp.ne.s32.totalorder %s20, %s23
    %p29 = scmp.eq.s32.totalorder %s10, 0
    %p30 = por %p28, %p29
    %p31 = scmp.ne.s32.totalorder %s20, %s23
    %p32 = scmp.eq.s32.totalorder %s15, 1
    %p33 = por %p31, %p32
    %p34 = scmp.ne.s32.totalorder %s23, %s24
    %p35 = scmp.eq.s32.totalorder %s15, 0
    %p36 = por %p34, %p35
    %p37 = scmp.ne.s32.totalorder %s23, %s24
    %p38 = scmp.eq.s32.totalorder %s16, 1
    %p39 = por %p37, %p38
    %p41 = scmp.ne.s32.totalorder %s24, %s40
    %p42 = scmp.eq.s32.totalorder %s16, 0
    %p43 = por %p41, %p42
    %s45 = sadd.s32 %s44, 1
    %p48 = scmp.eq.s32.totalorder %s10, 1
    %p49 = scmp.ne.s32.totalorder %s44, %s46
    %p50 = scmp.eq.s32.totalorder %s10, 0
    %p51 = por %p49, %p50
    %p52 = scmp.ne.s32.totalorder %s44, %s46
    %p53 = scmp.eq.s32.totalorder %s15, 1
    %p54 = por %p52, %p53
    %p55 = scmp.ne.s32.totalorder %s46, %s47
    %p56 = scmp.eq.s32.totalorder %s15, 0
    %p57 = por %p55, %p56
    %p58 = scmp.ne.s32.totalorder %s46, %s47
    %p59 = scmp.eq.s32.totalorder %s16, 1
    %p60 = por %p58, %p59
    %p62 = scmp.ne.s32.totalorder %s47, %s61
    %p63 = scmp.eq.s32.totalorder %s16, 0
    %p64 = por %p62, %p63
    %s66 = sadd.s32 %s65, 1
    %p69 = scmp.eq.s32.totalorder %s10, 1
    %p70 = scmp.ne.s32.totalorder %s65, %s67
    %p71 = scmp.eq.s32.totalorder %s10, 0
    %p72 = por %p70, %p71
    %p73 = scmp.ne.s32.totalorder %s65, %s67
    %p74 = scmp.eq.s32.totalorder %s15, 1
    %p75 = por %p73, %p74
    %p76 = scmp.ne.s32.totalorder %s67, %s68
    %p77 = scmp.eq.s32.totalorder %s15, 0
    %p78 = por %p76, %p77
    %p79 = scmp.ne.s32.totalorder %s67, %s68
    %p80 = scmp.eq.s32.totalorder %s16, 1
    %p81 = por %p79, %p80
    %p83 = scmp.ne.s32.totalorder %s68, %s82
    %p84 = scmp.eq.s32.totalorder %s16, 0
    %p85 = por %p83, %p84
    %s87 = sadd.s32 %s86, 1
    %p90 = scmp.eq.s32.totalorder %s10, 1
    %p91 = scmp.ne.s32.totalorder %s86, %s88
    %p92 = scmp.eq.s32.totalorder %s10, 0
    %p93 = por %p91, %p92
    %p94 = scmp.ne.s32.totalorder %s86, %s88
    %p95 = scmp.eq.s32.totalorder %s15, 1
    %p96 = por %p94, %p95
    %p97 = scmp.ne.s32.totalorder %s88, %s89
    %p98 = scmp.eq.s32.totalorder %s15, 0
    %p99 = por %p97, %p98
    %p100 = scmp.ne.s32.totalorder %s88, %s89
    %p101 = scmp.eq.s32.totalorder %s16, 1
    %p102 = por %p100, %p101
    %p104 = scmp.ne.s32.totalorder %s89, %s103
    %p105 = scmp.eq.s32.totalorder %s16, 0
    %p106 = por %p104, %p105
    %s107 = ssub.s32 %s10, %s17
    %p108 = scmp.eq.s32.totalorder %s107, 0
    %s110 = sadd.s32 %s109, 1
    %s111 = scalar_select %p108, %s109, %s110
    %p114 = pneg %p108
    %p115 = scmp.eq.s32.totalorder %s10, 1
    %p116 = por %p114, %p115
    %p117 = scmp.ne.s32.totalorder %s109, %s112
    %p118 = scmp.eq.s32.totalorder %s10, 0
    %p119 = por %p117, %p118
    %p120 = scmp.ne.s32.totalorder %s109, %s112
    %p121 = scmp.eq.s32.totalorder %s15, 1
    %p122 = por %p120, %p121
    %p123 = scmp.ne.s32.totalorder %s112, %s113
    %p124 = scmp.eq.s32.totalorder %s15, 0
    %p125 = por %p123, %p124
    %p126 = scmp.ne.s32.totalorder %s112, %s113
    %p127 = scmp.eq.s32.totalorder %s16, 1
    %p128 = por %p126, %p127
    %p130 = scmp.ne.s32.totalorder %s113, %s129
    %p131 = scmp.eq.s32.totalorder %s16, 0
    %p132 = por %p130, %p131
    %p133 = scmp.le.s32.totalorder 1, %s10
    %p134 = scmp.lt.s32.totalorder %s10, 3
    %p135 = pnand %p133, %p134
    %p136 = pneg %p135
    // Predicated region
    $region9: #{resize_conv.1} parent=5 // pred_check
      _
    $region10: #{resize_conv.1} parent=5 // pred_check_branch
      %138 = sbr.rel (%p135) target = $region12
    $region11: #{resize_conv.1} parent=5 // pred_region
      %s139 = ssub.s32 %s10, 1
      // Predicated region
      $region13: #{resize_conv.1} parent=11 // pred_check
        %p140 = pneg %p57
      $region14: #{resize_conv.1} parent=11 // pred_check_branch
        %142 = sbr.rel (%p140) target = $region16
      $region15: #{resize_conv.1} parent=11 // pred_region
        _
      $region16: #{resize_conv.1} parent=11 // pred_fallthru
        _
      // Predicated region
      $region17: #{resize_conv.1} parent=11 // pred_check
        %p143 = pneg %p78
      $region18: #{resize_conv.1} parent=11 // pred_check_branch
        %145 = sbr.rel (%p143) target = $region20
      $region19: #{resize_conv.1} parent=11 // pred_region
        _
      $region20: #{resize_conv.1} parent=11 // pred_fallthru
        _
      // Predicated region
      $region21: #{resize_conv.1} parent=11 // pred_check
        %p146 = pneg %p99
      $region22: #{resize_conv.1} parent=11 // pred_check_branch
        %148 = sbr.rel (%p146) target = $region24
      $region23: #{resize_conv.1} parent=11 // pred_region
        _
      $region24: #{resize_conv.1} parent=11 // pred_fallthru
        _
    $region12: #{resize_conv.1} parent=5 // pred_fallthru
      _
    %p149 = scmp.lt.s32.totalorder %s10, 2
    // Predicated region
    $region25: #{resize_conv.1} parent=5 // pred_check
      %p150 = pneg %p149
    $region26: #{resize_conv.1} parent=5 // pred_check_branch
      %152 = sbr.rel (%p150) target = $region28
    $region27: #{resize_conv.1} parent=5 // pred_region
      // Predicated region
      $region29: #{resize_conv.1} parent=27 // pred_check
        %p153 = pneg %p30
      $region30: #{resize_conv.1} parent=27 // pred_check_branch
        %155 = sbr.rel (%p153) target = $region32
      $region31: #{resize_conv.1} parent=27 // pred_region
        %p156 = scmp.lt.s32.totalorder %s10, 1
        %s157 = scalar_select %p156, %s10, 1
        %s158 = smul.addr %s157, 2
        %s159 = smul.addr %s158, 4
        %s160 = scalar_lea.vmem %s0, %s159
      $region32: #{resize_conv.1} parent=27 // pred_fallthru
        _
    $region28: #{resize_conv.1} parent=5 // pred_fallthru
      _
    %p161 = scmp.le.s32.totalorder 1, %s10
    %p162 = scmp.lt.s32.totalorder %s10, 3
    %p163 = pnand %p161, %p162
    %p164 = pneg %p163
    // Predicated region
    $region33: #{resize_conv.1} parent=5 // pred_check
      _
    $region34: #{resize_conv.1} parent=5 // pred_check_branch
      %166 = sbr.rel (%p163) target = $region36
    $region35: #{resize_conv.1} parent=5 // pred_region
      %s167 = ssub.s32 %s10, 1
      %p168 = scmp.lt.s32.totalorder %s15, 1
      %s169 = scalar_select %p168, %s15, 1
      %s170 = smul.addr %s169, 2
      %s171 = smul.addr %s170, 4
      %s172 = scalar_lea.vmem %s0, %s171
      %p173 = pneg %p36
      %p174 = pneg %p33
      %p175 = pneg %p57
      %p176 = pneg %p54
      %p177 = pneg %p78
      %p178 = pneg %p75
      %p179 = pneg %p99
      %p180 = pneg %p96
      %p181 = pneg %p125
      %p182 = pneg %p122
      %p183 = scmp.lt.s32.totalorder %s15, 1
      %s184 = scalar_select %p183, %s15, 1
      %s185 = smul.addr %s184, 8
      %s186 = smul.addr %s185, 8
      %s187 = scalar_lea.vmem %s4, %s186
      %p188 = scmp.lt.s32.totalorder %s15, 1
      %s189 = scalar_select %p188, %s15, 1
      %s190 = smul.addr %s189, 2
      %s191 = smul.addr %s190, 4
      %s192 = scalar_lea.vmem %s0, %s191
      %p193 = scmp.lt.s32.totalorder %s15, 1
      %s194 = scalar_select %p193, %s15, 1
      %s195 = smul.addr %s194, 8
      %s196 = smul.addr %s195, 8
      %s197 = scalar_lea.vmem %s4, %s196
      %v198 = vld [vmem:[%s192] sm:$0xff]
      %v200 = vcombine.high %v198, %v198
      %201 = vrot.lane.b32.xlu0 %v198, 17
      %v202 = vpop.permute.xlu0 %201
      %203 = vrot.lane.b32.xlu0 %v200, 17
      %v204 = vpop.permute.xlu0 %203
      %vm205 = vcmask 138240
      %v206 = vsel %vm205, %v202, %v204
      %v209 = vsel %vm205, 0.0, %v202
      %v210 = vld [vmem:[%s2] sm:$0x3]
      %v212 = vlaneseq
      %v213 = vshrl.u32 %v212, 7
      %v214 = vsub.s32 0, %v213
      %v215 = vrot.slane %v210, %v214
      %v216 = vlaneseq
      %v217 = vshrl.u32 %v216, 7
      %v218 = vsub.s32 1, %v217
      %v219 = vrot.slane %v210, %v218
      %v222 = vmul.f32 %v209, %v215
      %v223 = vmul.f32 %v206, %v219
      %v224 = vld [vmem:[%s1] sm:$0xff]
      %v225 = vld [vmem:[%s1 + $0x8] sm:$0xff]
      %v226 = vld [vmem:[%s1 + $0x10] sm:$0xff]
      %v227 = vld [vmem:[%s1 + $0x18] sm:$0xff]
      %228 = vrot.lane.b32.xlu0 %v198, 16
      %v229 = vpop.permute.xlu0 %228
      %230 = vrot.lane.b32.xlu0 %v200, 16
      %v231 = vpop.permute.xlu0 %230
      %vm232 = vcmask 130048
      %v233 = vsel %vm232, %v229, %v231
      %v236 = vsel %vm232, 0.0, %v229
      %s237 = scalar_lea.vmem %s2, 2
      %v238 = vld [vmem:[%s237] sm:$0x3]
      %v240 = vlaneseq
      %v241 = vshrl.u32 %v240, 7
      %v242 = vsub.s32 0, %v241
      %v243 = vrot.slane %v238, %v242
      %v244 = vlaneseq
      %v245 = vshrl.u32 %v244, 7
      %v246 = vsub.s32 1, %v245
      %v247 = vrot.slane %v238, %v246
      %v250 = vmul.f32 %v236, %v243
      %v251 = vmul.f32 %v233, %v247
      %s252 = scalar_lea.vmem %s1, 32
      %v253 = vld [vmem:[%s252] sm:$0xff]
      %v254 = vld [vmem:[%s252 + $0x8] sm:$0xff]
      %v255 = vld [vmem:[%s252 + $0x10] sm:$0xff]
      %v256 = vld [vmem:[%s252 + $0x18] sm:$0xff]
      %vm257 = vcmask 31744
      %v259 = vsel %vm257, %v253, 0
      %v262 = vsel %vm257, %v254, 0
      %v265 = vsel %vm257, %v255, 0
      %v268 = vsel %vm257, %v256, 0
      %vm270 = vcmask 1043456
      %v272 = vsel %vm270, %v250, 0
      %v275 = vsel %vm270, %v251, 0
      %277 = vmatprep.subr.mxu0 %v275
      %278 = vmatpush1.msra.mxu0 %v272
      %279 = vmatprep.subr.mxu0 0.0
      %280 = vmatpush1.msra.mxu0 0.0
      %281 = vmatprep.subr.mxu0 0.0
      %282 = vmatpush1.msra.mxu0 0.0
      %283 = vmatprep.subr.mxu0 0.0
      %284 = vmatpush1.msra.mxu0 0.0
      %285 = vmatprep.subr.mxu0 0.0
      %286 = vmatpush1.msra.mxu0 0.0
      %287 = vmatprep.subr.mxu0 0.0
      %288 = vmatpush1.msra.mxu0 0.0
      %289 = vmatprep.subr.mxu0 0.0
      %290 = vmatpush1.msra.mxu0 0.0
      %291 = vmatprep.subr.mxu0 0.0
      %292 = vmatpush1.msra.mxu0 0.0
      %293 = vmatprep.subr.mxu0 0.0
      %294 = vmatpush1.msra.mxu0 0.0
      %295 = vmatprep.subr.mxu0 0.0
      %296 = vmatpush1.msra.mxu0 0.0
      %297 = vmatprep.subr.mxu0 0.0
      %298 = vmatpush1.msra.mxu0 0.0
      %299 = vmatprep.subr.mxu0 0.0
      %300 = vmatpush1.msra.mxu0 0.0
      %301 = vmatprep.subr.mxu0 0.0
      %302 = vmatpush1.msra.mxu0 0.0
      %303 = vmatprep.subr.mxu0 0.0
      %304 = vmatpush1.msra.mxu0 0.0
      %305 = vmatprep.subr.mxu0 0.0
      %306 = vmatpush1.msra.mxu0 0.0
      %307 = vmatprep.subr.mxu0 0.0
      %308 = vmatpush1.msra.mxu0 0.0
      %309 = vmatprep.subr.mxu0 0.0
      %310 = vmatpush1.msra.mxu0 0.0
      %311 = vmatprep.subr.mxu0 0.0
      %312 = vmatpush1.msra.mxu0 0.0
      %313 = vmatprep.subr.mxu0 0.0
      %314 = vmatpush1.msra.mxu0 0.0
      %315 = vmatprep.subr.mxu0 0.0
      %316 = vmatpush1.msra.mxu0 0.0
      %317 = vmatprep.subr.mxu0 0.0
      %318 = vmatpush1.msra.mxu0 0.0
      %319 = vmatprep.subr.mxu0 0.0
      %320 = vmatpush1.msra.mxu0 0.0
      %321 = vmatprep.subr.mxu0 0.0
      %322 = vmatpush1.msra.mxu0 0.0
      %323 = vmatprep.subr.mxu0 0.0
      %324 = vmatpush1.msra.mxu0 0.0
      %325 = vmatprep.subr.mxu0 0.0
      %326 = vmatpush1.msra.mxu0 0.0
      %327 = vmatprep.subr.mxu0 0.0
      %328 = vmatpush1.msra.mxu0 0.0
      %329 = vmatprep.subr.mxu0 0.0
      %330 = vmatpush1.msra.mxu0 0.0
      %331 = vmatprep.subr.mxu0 0.0
      %332 = vmatpush1.msra.mxu0 0.0
      %333 = vmatprep.subr.mxu0 0.0
      %334 = vmatpush1.msra.mxu0 0.0
      %335 = vmatprep.subr.mxu0 0.0
      %336 = vmatpush1.msra.mxu0 0.0
      %337 = vmatprep.subr.mxu0 0.0
      %338 = vmatpush1.msra.mxu0 0.0
      %339 = vmatprep.subr.mxu0 0.0
      %340 = vmatpush1.msra.mxu0 0.0
      %341 = vmatprep.mubr.f32.mxu0 0.0
      %342 = vmatmul.mubr.f32.gmra.mrb[0].mxu0 %v259
      %v343 = vpop.f32.mrb[0].mxu0
      %v344 = vadd.f32 0.0, %v343
      %v345 = vpop.f32.mrb[0].mxu0
      %v346 = vadd.f32 0.0, %v345
      %347 = vmatprep.mubr.f32.mxu0 0.0
      %348 = vmatmul.mubr.f32.gmra.mrb[0].mxu0 %v262
      %v349 = vpop.f32.mrb[0].mxu0
      %v350 = vadd.f32 0.0, %v349
      %v351 = vpop.f32.mrb[0].mxu0
      %v352 = vadd.f32 0.0, %v351
      %353 = vmatprep.mubr.f32.mxu0 0.0
      %354 = vmatmul.mubr.f32.gmra.mrb[0].mxu0 %v265
      %v355 = vpop.f32.mrb[0].mxu0
      %v356 = vadd.f32 0.0, %v355
      %v357 = vpop.f32.mrb[0].mxu0
      %v358 = vadd.f32 0.0, %v357
      %359 = vmatprep.mubr.f32.mxu0 0.0
      %360 = vmatmul.mubr.f32.gmra.mrb[0].mxu0 %v268
      %v361 = vpop.f32.mrb[0].mxu0
      %v362 = vadd.f32 0.0, %v361
      %v363 = vpop.f32.mrb[0].mxu0
      %v364 = vadd.f32 0.0, %v363
      %365 = vdwg.mxu0
      %v367 = vsel %vm257, %v224, 0
      %v370 = vsel %vm257, %v225, 0
      %v373 = vsel %vm257, %v226, 0
      %v376 = vsel %vm257, %v227, 0
      %v379 = vsel %vm270, %v222, 0
      %v382 = vsel %vm270, %v223, 0
      %384 = vmatprep.subr.mxu0 %v382
      %385 = vmatpush1.msra.mxu0 %v379
      %386 = vmatprep.subr.mxu0 0.0
      %387 = vmatpush1.msra.mxu0 0.0
      %388 = vmatprep.subr.mxu0 0.0
      %389 = vmatpush1.msra.mxu0 0.0
      %390 = vmatprep.subr.mxu0 0.0
      %391 = vmatpush1.msra.mxu0 0.0
      %392 = vmatprep.subr.mxu0 0.0
      %393 = vmatpush1.msra.mxu0 0.0
      %394 = vmatprep.subr.mxu0 0.0
      %395 = vmatpush1.msra.mxu0 0.0
      %396 = vmatprep.subr.mxu0 0.0
      %397 = vmatpush1.msra.mxu0 0.0
      %398 = vmatprep.subr.mxu0 0.0
      %399 = vmatpush1.msra.mxu0 0.0
      %400 = vmatprep.subr.mxu0 0.0
      %401 = vmatpush1.msra.mxu0 0.0
      %402 = vmatprep.subr.mxu0 0.0
      %403 = vmatpush1.msra.mxu0 0.0
      %404 = vmatprep.subr.mxu0 0.0
      %405 = vmatpush1.msra.mxu0 0.0
      %406 = vmatprep.subr.mxu0 0.0
      %407 = vmatpush1.msra.mxu0 0.0
      %408 = vmatprep.subr.mxu0 0.0
      %409 = vmatpush1.msra.mxu0 0.0
      %410 = vmatprep.subr.mxu0 0.0
      %411 = vmatpush1.msra.mxu0 0.0
      %412 = vmatprep.subr.mxu0 0.0
      %413 = vmatpush1.msra.mxu0 0.0
      %414 = vmatprep.subr.mxu0 0.0
      %415 = vmatpush1.msra.mxu0 0.0
      %416 = vmatprep.subr.mxu0 0.0
      %417 = vmatpush1.msra.mxu0 0.0
      %418 = vmatprep.subr.mxu0 0.0
      %419 = vmatpush1.msra.mxu0 0.0
      %420 = vmatprep.subr.mxu0 0.0
      %421 = vmatpush1.msra.mxu0 0.0
      %422 = vmatprep.subr.mxu0 0.0
      %423 = vmatpush1.msra.mxu0 0.0
      %424 = vmatprep.subr.mxu0 0.0
      %425 = vmatpush1.msra.mxu0 0.0
      %426 = vmatprep.subr.mxu0 0.0
      %427 = vmatpush1.msra.mxu0 0.0
      %428 = vmatprep.subr.mxu0 0.0
      %429 = vmatpush1.msra.mxu0 0.0
      %430 = vmatprep.subr.mxu0 0.0
      %431 = vmatpush1.msra.mxu0 0.0
      %432 = vmatprep.subr.mxu0 0.0
      %433 = vmatpush1.msra.mxu0 0.0
      %434 = vmatprep.subr.mxu0 0.0
      %435 = vmatpush1.msra.mxu0 0.0
      %436 = vmatprep.subr.mxu0 0.0
      %437 = vmatpush1.msra.mxu0 0.0
      %438 = vmatprep.subr.mxu0 0.0
      %439 = vmatpush1.msra.mxu0 0.0
      %440 = vmatprep.subr.mxu0 0.0
      %441 = vmatpush1.msra.mxu0 0.0
      %442 = vmatprep.subr.mxu0 0.0
      %443 = vmatpush1.msra.mxu0 0.0
      %444 = vmatprep.subr.mxu0 0.0
      %445 = vmatpush1.msra.mxu0 0.0
      %446 = vmatprep.subr.mxu0 0.0
      %447 = vmatpush1.msra.mxu0 0.0
      %448 = vmatprep.mubr.f32.mxu0 0.0
      %449 = vmatmul.mubr.f32.gmra.mrb[0].mxu0 %v367
      %v450 = vpop.f32.mrb[0].mxu0
      %v451 = vadd.f32 %v344, %v450
      %v452 = vpop.f32.mrb[0].mxu0
      %v453 = vadd.f32 %v346, %v452
      %454 = vmatprep.mubr.f32.mxu0 0.0
      %455 = vmatmul.mubr.f32.gmra.mrb[0].mxu0 %v370
      %v456 = vpop.f32.mrb[0].mxu0
      %v457 = vadd.f32 %v350, %v456
      %v458 = vpop.f32.mrb[0].mxu0
      %v459 = vadd.f32 %v352, %v458
      %460 = vmatprep.mubr.f32.mxu0 0.0
      %461 = vmatmul.mubr.f32.gmra.mrb[0].mxu0 %v373
      %v462 = vpop.f32.mrb[0].mxu0
      %v463 = vadd.f32 %v356, %v462
      %v464 = vpop.f32.mrb[0].mxu0
      %v465 = vadd.f32 %v358, %v464
      %466 = vmatprep.mubr.f32.mxu0 0.0
      %467 = vmatmul.mubr.f32.gmra.mrb[0].mxu0 %v376
      %v468 = vpop.f32.mrb[0].mxu0
      %v469 = vadd.f32 %v362, %v468
      %v470 = vpop.f32.mrb[0].mxu0
      %v471 = vadd.f32 %v364, %v470
      %472 = vdwg.mxu0
      %473 = vrot.lane.b32.xlu0 %v198, 15
      %v474 = vpop.permute.xlu0 %473
      %475 = vrot.lane.b32.xlu0 %v200, 15
      %v476 = vpop.permute.xlu0 %475
      %vm477 = vcmask 121856
      %v478 = vsel %vm477, %v474, %v476
      %v481 = vsel %vm477, 0.0, %v474
      %s482 = scalar_lea.vmem %s2, 4
      %v483 = vld [vmem:[%s482] sm:$0x3]
      %v485 = vlaneseq
      %v486 = vshrl.u32 %v485, 7
      %v487 = vsub.s32 0, %v486
      %v488 = vrot.slane %v483, %v487
      %v489 = vlaneseq
      %v490 = vshrl.u32 %v489, 7
      %v491 = vsub.s32 1, %v490
      %v492 = vrot.slane %v483, %v491
      %v495 = vmul.f32 %v481, %v488
      %v496 = vmul.f32 %v478, %v492
      %s497 = scalar_lea.vmem %s1, 64
      %v498 = vld [vmem:[%s497] sm:$0xff]
      %v499 = vld [vmem:[%s497 + $0x8] sm:$0xff]
      %v500 = vld [vmem:[%s497 + $0x10] sm:$0xff]
      %v501 = vld [vmem:[%s497 + $0x18] sm:$0xff]
      %v503 = vsel %vm257, %v498, 0
      %v506 = vsel %vm257, %v499, 0
      %v509 = vsel %vm257, %v500, 0
      %v512 = vsel %vm257, %v501, 0
      %v515 = vsel %vm270, %v495, 0
      %v518 = vsel %vm270, %v496, 0
      %520 = vmatprep.subr.mxu0 %v518
      %521 = vmatpush1.msra.mxu0 %v515
      %522 = vmatprep.subr.mxu0 0.0
      %523 = vmatpush1.msra.mxu0 0.0
      %524 = vmatprep.subr.mxu0 0.0
      %525 = vmatpush1.msra.mxu0 0.0
      %526 = vmatprep.subr.mxu0 0.0
      %527 = vmatpush1.msra.mxu0 0.0
      %528 = vmatprep.subr.mxu0 0.0
      %529 = vmatpush1.msra.mxu0 0.0
      %530 = vmatprep.subr.mxu0 0.0
      %531 = vmatpush1.msra.mxu0 0.0
      %532 = vmatprep.subr.mxu0 0.0
      %533 = vmatpush1.msra.mxu0 0.0
      %534 = vmatprep.subr.mxu0 0.0
      %535 = vmatpush1.msra.mxu0 0.0
      %536 = vmatprep.subr.mxu0 0.0
      %537 = vmatpush1.msra.mxu0 0.0
      %538 = vmatprep.subr.mxu0 0.0
      %539 = vmatpush1.msra.mxu0 0.0
      %540 = vmatprep.subr.mxu0 0.0
      %541 = vmatpush1.msra.mxu0 0.0
      %542 = vmatprep.subr.mxu0 0.0
      %543 = vmatpush1.msra.mxu0 0.0
      %544 = vmatprep.subr.mxu0 0.0
      %545 = vmatpush1.msra.mxu0 0.0
      %546 = vmatprep.subr.mxu0 0.0
      %547 = vmatpush1.msra.mxu0 0.0
      %548 = vmatprep.subr.mxu0 0.0
      %549 = vmatpush1.msra.mxu0 0.0
      %550 = vmatprep.subr.mxu0 0.0
      %551 = vmatpush1.msra.mxu0 0.0
      %552 = vmatprep.subr.mxu0 0.0
      %553 = vmatpush1.msra.mxu0 0.0
      %554 = vmatprep.subr.mxu0 0.0
      %555 = vmatpush1.msra.mxu0 0.0
      %556 = vmatprep.subr.mxu0 0.0
      %557 = vmatpush1.msra.mxu0 0.0
      %558 = vmatprep.subr.mxu0 0.0
      %559 = vmatpush1.msra.mxu0 0.0
      %560 = vmatprep.subr.mxu0 0.0
      %561 = vmatpush1.msra.mxu0 0.0
      %562 = vmatprep.subr.mxu0 0.0
      %563 = vmatpush1.msra.mxu0 0.0
      %564 = vmatprep.subr.mxu0 0.0
      %565 = vmatpush1.msra.mxu0 0.0
      %566 = vmatprep.subr.mxu0 0.0
      %567 = vmatpush1.msra.mxu0 0.0
      %568 = vmatprep.subr.mxu0 0.0
      %569 = vmatpush1.msra.mxu0 0.0
      %570 = vmatprep.subr.mxu0 0.0
      %571 = vmatpush1.msra.mxu0 0.0
      %572 = vmatprep.subr.mxu0 0.0
      %573 = vmatpush1.msra.mxu0 0.0
      %574 = vmatprep.subr.mxu0 0.0
      %575 = vmatpush1.msra.mxu0 0.0
      %576 = vmatprep.subr.mxu0 0.0
      %577 = vmatpush1.msra.mxu0 0.0
      %578 = vmatprep.subr.mxu0 0.0
      %579 = vmatpush1.msra.mxu0 0.0
      %580 = vmatprep.subr.mxu0 0.0
      %581 = vmatpush1.msra.mxu0 0.0
      %582 = vmatprep.subr.mxu0 0.0
      %583 = vmatpush1.msra.mxu0 0.0
      %584 = vmatprep.mubr.f32.mxu0 0.0
      %585 = vmatmul.mubr.f32.gmra.mrb[0].mxu0 %v503
      %v586 = vpop.f32.mrb[0].mxu0
      %v587 = vadd.f32 0.0, %v586
      %v588 = vpop.f32.mrb[0].mxu0
      %v589 = vadd.f32 0.0, %v588
      %590 = vmatprep.mubr.f32.mxu0 0.0
      %591 = vmatmul.mubr.f32.gmra.mrb[0].mxu0 %v506
      %v592 = vpop.f32.mrb[0].mxu0
      %v593 = vadd.f32 0.0, %v592
      %v594 = vpop.f32.mrb[0].mxu0
      %v595 = vadd.f32 0.0, %v594
      %596 = vmatprep.mubr.f32.mxu0 0.0
      %597 = vmatmul.mubr.f32.gmra.mrb[0].mxu0 %v509
      %v598 = vpop.f32.mrb[0].mxu0
      %v599 = vadd.f32 0.0, %v598
      %v600 = vpop.f32.mrb[0].mxu0
      %v601 = vadd.f32 0.0, %v600
      %602 = vmatprep.mubr.f32.mxu0 0.0
      %603 = vmatmul.mubr.f32.gmra.mrb[0].mxu0 %v512
      %v604 = vpop.f32.mrb[0].mxu0
      %v605 = vadd.f32 0.0, %v604
      %v606 = vpop.f32.mrb[0].mxu0
      %v607 = vadd.f32 0.0, %v606
      %608 = vdwg.mxu0
      %v609 = vadd.f32 %v451, %v587
      %v610 = vadd.f32 %v453, %v589
      %v611 = vadd.f32 %v457, %v593
      %v612 = vadd.f32 %v459, %v595
      %v613 = vadd.f32 %v463, %v599
      %v614 = vadd.f32 %v465, %v601
      %v615 = vadd.f32 %v469, %v605
      %v616 = vadd.f32 %v471, %v607
      %617 = vrot.lane.b32.xlu0 %v198, 1
      %v618 = vpop.permute.xlu0 %617
      %619 = vrot.lane.b32.xlu0 %v200, 1
      %v620 = vpop.permute.xlu0 %619
      %vm621 = vcmask 7168
      %v622 = vsel %vm621, %v618, %v620
      %v625 = vsel %vm621, 0.0, %v618
      %s626 = scalar_lea.vmem %s2, 6
      %v627 = vld [vmem:[%s626] sm:$0x3]
      %v629 = vlaneseq
      %v630 = vshrl.u32 %v629, 7
      %v631 = vsub.s32 0, %v630
      %v632 = vrot.slane %v627, %v631
      %v633 = vlaneseq
      %v634 = vshrl.u32 %v633, 7
      %v635 = vsub.s32 1, %v634
      %v636 = vrot.slane %v627, %v635
      %v639 = vmul.f32 %v625, %v632
      %v640 = vmul.f32 %v622, %v636
      %s641 = scalar_lea.vmem %s1, 96
      %v642 = vld [vmem:[%s641] sm:$0xff]
      %v643 = vld [vmem:[%s641 + $0x8] sm:$0xff]
      %v644 = vld [vmem:[%s641 + $0x10] sm:$0xff]
      %v645 = vld [vmem:[%s641 + $0x18] sm:$0xff]
      %v647 = vsel %vm257, %v642, 0
      %v650 = vsel %vm257, %v643, 0
      %v653 = vsel %vm257, %v644, 0
      %v656 = vsel %vm257, %v645, 0
      %v659 = vsel %vm270, %v639, 0
      %v662 = vsel %vm270, %v640, 0
      %664 = vmatprep.subr.mxu0 %v662
      %665 = vmatpush1.msra.mxu0 %v659
      %666 = vmatprep.subr.mxu0 0.0
      %667 = vmatpush1.msra.mxu0 0.0
      %668 = vmatprep.subr.mxu0 0.0
      %669 = vmatpush1.msra.mxu0 0.0
      %670 = vmatprep.subr.mxu0 0.0
      %671 = vmatpush1.msra.mxu0 0.0
      %672 = vmatprep.subr.mxu0 0.0
      %673 = vmatpush1.msra.mxu0 0.0
      %674 = vmatprep.subr.mxu0 0.0
      %675 = vmatpush1.msra.mxu0 0.0
      %676 = vmatprep.subr.mxu0 0.0
      %677 = vmatpush1.msra.mxu0 0.0
      %678 = vmatprep.subr.mxu0 0.0
      %679 = vmatpush1.msra.mxu0 0.0
      %680 = vmatprep.subr.mxu0 0.0
      %681 = vmatpush1.msra.mxu0 0.0
      %682 = vmatprep.subr.mxu0 0.0
      %683 = vmatpush1.msra.mxu0 0.0
      %684 = vmatprep.subr.mxu0 0.0
      %685 = vmatpush1.msra.mxu0 0.0
      %686 = vmatprep.subr.mxu0 0.0
      %687 = vmatpush1.msra.mxu0 0.0
      %688 = vmatprep.subr.mxu0 0.0
      %689 = vmatpush1.msra.mxu0 0.0
      %690 = vmatprep.subr.mxu0 0.0
      %691 = vmatpush1.msra.mxu0 0.0
      %692 = vmatprep.subr.mxu0 0.0
      %693 = vmatpush1.msra.mxu0 0.0
      %694 = vmatprep.subr.mxu0 0.0
      %695 = vmatpush1.msra.mxu0 0.0
      %696 = vmatprep.subr.mxu0 0.0
      %697 = vmatpush1.msra.mxu0 0.0
      %698 = vmatprep.subr.mxu0 0.0
      %699 = vmatpush1.msra.mxu0 0.0
      %700 = vmatprep.subr.mxu0 0.0
      %701 = vmatpush1.msra.mxu0 0.0
      %702 = vmatprep.subr.mxu0 0.0
      %703 = vmatpush1.msra.mxu0 0.0
      %704 = vmatprep.subr.mxu0 0.0
      %705 = vmatpush1.msra.mxu0 0.0
      %706 = vmatprep.subr.mxu0 0.0
      %707 = vmatpush1.msra.mxu0 0.0
      %708 = vmatprep.subr.mxu0 0.0
      %709 = vmatpush1.msra.mxu0 0.0
      %710 = vmatprep.subr.mxu0 0.0
      %711 = vmatpush1.msra.mxu0 0.0
      %712 = vmatprep.subr.mxu0 0.0
      %713 = vmatpush1.msra.mxu0 0.0
      %714 = vmatprep.subr.mxu0 0.0
      %715 = vmatpush1.msra.mxu0 0.0
      %716 = vmatprep.subr.mxu0 0.0
      %717 = vmatpush1.msra.mxu0 0.0
      %718 = vmatprep.subr.mxu0 0.0
      %719 = vmatpush1.msra.mxu0 0.0
      %720 = vmatprep.subr.mxu0 0.0
      %721 = vmatpush1.msra.mxu0 0.0
      %722 = vmatprep.subr.mxu0 0.0
      %723 = vmatpush1.msra.mxu0 0.0
      %724 = vmatprep.subr.mxu0 0.0
      %725 = vmatpush1.msra.mxu0 0.0
      %726 = vmatprep.subr.mxu0 0.0
      %727 = vmatpush1.msra.mxu0 0.0
      %728 = vmatprep.mubr.f32.mxu0 0.0
      %729 = vmatmul.mubr.f32.gmra.mrb[0].mxu0 %v647
      %v730 = vpop.f32.mrb[0].mxu0
      %v731 = vadd.f32 0.0, %v730
      %v732 = vpop.f32.mrb[0].mxu0
      %v733 = vadd.f32 0.0, %v732
      %734 = vmatprep.mubr.f32.mxu0 0.0
      %735 = vmatmul.mubr.f32.gmra.mrb[0].mxu0 %v650
      %v736 = vpop.f32.mrb[0].mxu0
      %v737 = vadd.f32 0.0, %v736
      %v738 = vpop.f32.mrb[0].mxu0
      %v739 = vadd.f32 0.0, %v738
      %740 = vmatprep.mubr.f32.mxu0 0.0
      %741 = vmatmul.mubr.f32.gmra.mrb[0].mxu0 %v653
      %v742 = vpop.f32.mrb[0].mxu0
      %v743 = vadd.f32 0.0, %v742
      %v744 = vpop.f32.mrb[0].mxu0
      %v745 = vadd.f32 0.0, %v744
      %746 = vmatprep.mubr.f32.mxu0 0.0
      %747 = vmatmul.mubr.f32.gmra.mrb[0].mxu0 %v656
      %v748 = vpop.f32.mrb[0].mxu0
      %v749 = vadd.f32 0.0, %v748
      %v750 = vpop.f32.mrb[0].mxu0
      %v751 = vadd.f32 0.0, %v750
      %752 = vdwg.mxu0
      %v753 = vadd.f32 %v609, %v731
      %v754 = vadd.f32 %v610, %v733
      %v755 = vadd.f32 %v611, %v737
      %v756 = vadd.f32 %v612, %v739
      %v757 = vadd.f32 %v613, %v743
      %v758 = vadd.f32 %v614, %v745
      %v759 = vadd.f32 %v615, %v749
      %v760 = vadd.f32 %v616, %v751
      %s761 = scalar_lea.vmem %s2, 8
      %v762 = vld [vmem:[%s761] sm:$0x3]
      %v764 = vlaneseq
      %v765 = vshrl.u32 %v764, 7
      %v766 = vsub.s32 0, %v765
      %v767 = vrot.slane %v762, %v766
      %v768 = vlaneseq
      %v769 = vshrl.u32 %v768, 7
      %v770 = vsub.s32 1, %v769
      %v771 = vrot.slane %v762, %v770
      %v772 = vcombine.low %v767, %v771
      %v774 = vmul.f32 %v198, %v772
      %s775 = scalar_lea.vmem %s1, 128
      %v776 = vld [vmem:[%s775] sm:$0xff]
      %v777 = vld [vmem:[%s775 + $0x8] sm:$0xff]
      %v778 = vld [vmem:[%s775 + $0x10] sm:$0xff]
      %v779 = vld [vmem:[%s775 + $0x18] sm:$0xff]
      %v781 = vcombine.high %v774, %v774
      %v783 = vsel %vm257, %v776, 0
      %v786 = vsel %vm257, %v777, 0
      %v789 = vsel %vm257, %v778, 0
      %v792 = vsel %vm257, %v779, 0
      %v794 = vsel %vm270, %v774, 0
      %v796 = vsel %vm270, %v781, 0
      %798 = vmatprep.subr.mxu0 %v796
      %799 = vmatpush1.msra.mxu0 %v794
      %800 = vmatprep.subr.mxu0 0.0
      %801 = vmatpush1.msra.mxu0 0.0
      %802 = vmatprep.subr.mxu0 0.0
      %803 = vmatpush1.msra.mxu0 0.0
      %804 = vmatprep.subr.mxu0 0.0
      %805 = vmatpush1.msra.mxu0 0.0
      %806 = vmatprep.subr.mxu0 0.0
      %807 = vmatpush1.msra.mxu0 0.0
      %808 = vmatprep.subr.mxu0 0.0
      %809 = vmatpush1.msra.mxu0 0.0
      %810 = vmatprep.subr.mxu0 0.0
      %811 = vmatpush1.msra.mxu0 0.0
      %812 = vmatprep.subr.mxu0 0.0
      %813 = vmatpush1.msra.mxu0 0.0
      %814 = vmatprep.subr.mxu0 0.0
      %815 = vmatpush1.msra.mxu0 0.0
      %816 = vmatprep.subr.mxu0 0.0
      %817 = vmatpush1.msra.mxu0 0.0
      %818 = vmatprep.subr.mxu0 0.0
      %819 = vmatpush1.msra.mxu0 0.0
      %820 = vmatprep.subr.mxu0 0.0
      %821 = vmatpush1.msra.mxu0 0.0
      %822 = vmatprep.subr.mxu0 0.0
      %823 = vmatpush1.msra.mxu0 0.0
      %824 = vmatprep.subr.mxu0 0.0
      %825 = vmatpush1.msra.mxu0 0.0
      %826 = vmatprep.subr.mxu0 0.0
      %827 = vmatpush1.msra.mxu0 0.0
      %828 = vmatprep.subr.mxu0 0.0
      %829 = vmatpush1.msra.mxu0 0.0
      %830 = vmatprep.subr.mxu0 0.0
      %831 = vmatpush1.msra.mxu0 0.0
      %832 = vmatprep.subr.mxu0 0.0
      %833 = vmatpush1.msra.mxu0 0.0
      %834 = vmatprep.subr.mxu0 0.0
      %835 = vmatpush1.msra.mxu0 0.0
      %836 = vmatprep.subr.mxu0 0.0
      %837 = vmatpush1.msra.mxu0 0.0
      %838 = vmatprep.subr.mxu0 0.0
      %839 = vmatpush1.msra.mxu0 0.0
      %840 = vmatprep.subr.mxu0 0.0
      %841 = vmatpush1.msra.mxu0 0.0
      %842 = vmatprep.subr.mxu0 0.0
      %843 = vmatpush1.msra.mxu0 0.0
      %844 = vmatprep.subr.mxu0 0.0
      %845 = vmatpush1.msra.mxu0 0.0
      %846 = vmatprep.subr.mxu0 0.0
      %847 = vmatpush1.msra.mxu0 0.0
      %848 = vmatprep.subr.mxu0 0.0
      %849 = vmatpush1.msra.mxu0 0.0
      %850 = vmatprep.subr.mxu0 0.0
      %851 = vmatpush1.msra.mxu0 0.0
      %852 = vmatprep.subr.mxu0 0.0
      %853 = vmatpush1.msra.mxu0 0.0
      %854 = vmatprep.subr.mxu0 0.0
      %855 = vmatpush1.msra.mxu0 0.0
      %856 = vmatprep.subr.mxu0 0.0
      %857 = vmatpush1.msra.mxu0 0.0
      %858 = vmatprep.subr.mxu0 0.0
      %859 = vmatpush1.msra.mxu0 0.0
      %860 = vmatprep.subr.mxu0 0.0
      %861 = vmatpush1.msra.mxu0 0.0
      %862 = vmatprep.mubr.f32.mxu0 0.0
      %863 = vmatmul.mubr.f32.gmra.mrb[0].mxu0 %v783
      %v864 = vpop.f32.mrb[0].mxu0
      %v865 = vadd.f32 0.0, %v864
      %v866 = vpop.f32.mrb[0].mxu0
      %v867 = vadd.f32 0.0, %v866
      %868 = vmatprep.mubr.f32.mxu0 0.0
      %869 = vmatmul.mubr.f32.gmra.mrb[0].mxu0 %v786
      %v870 = vpop.f32.mrb[0].mxu0
      %v871 = vadd.f32 0.0, %v870
      %v872 = vpop.f32.mrb[0].mxu0
      %v873 = vadd.f32 0.0, %v872
      %874 = vmatprep.mubr.f32.mxu0 0.0
      %875 = vmatmul.mubr.f32.gmra.mrb[0].mxu0 %v789
      %v876 = vpop.f32.mrb[0].mxu0
      %v877 = vadd.f32 0.0, %v876
      %v878 = vpop.f32.mrb[0].mxu0
      %v879 = vadd.f32 0.0, %v878
      %880 = vmatprep.mubr.f32.mxu0 0.0
      %881 = vmatmul.mubr.f32.gmra.mrb[0].mxu0 %v792
      %v882 = vpop.f32.mrb[0].mxu0
      %v883 = vadd.f32 0.0, %v882
      %v884 = vpop.f32.mrb[0].mxu0
      %v885 = vadd.f32 0.0, %v884
      %886 = vdwg.mxu0
      %v887 = vadd.f32 %v753, %v865
      %v888 = vadd.f32 %v754, %v867
      %v889 = vadd.f32 %v755, %v871
      %v890 = vadd.f32 %v756, %v873
      %v891 = vadd.f32 %v757, %v877
      %v892 = vadd.f32 %v758, %v879
      %v893 = vadd.f32 %v759, %v883
      %v894 = vadd.f32 %v760, %v885
      %895 = vrot.lane.b32.xlu0 %v198, 127
      %v896 = vpop.permute.xlu0 %895
      %897 = vrot.lane.b32.xlu0 %v200, 127
      %v898 = vpop.permute.xlu0 %897
      %vm899 = vcmask 1039360
      %v900 = vsel %vm899, %v896, %v898
      %v903 = vsel %vm899, %v898, 0.0
      %s904 = scalar_lea.vmem %s2, 10
      %v905 = vld [vmem:[%s904] sm:$0x3]
      %v907 = vlaneseq
      %v908 = vshrl.u32 %v907, 7
      %v909 = vsub.s32 0, %v908
      %v910 = vrot.slane %v905, %v909
      %v911 = vlaneseq
      %v912 = vshrl.u32 %v911, 7
      %v913 = vsub.s32 1, %v912
      %v914 = vrot.slane %v905, %v913
      %v917 = vmul.f32 %v900, %v910
      %v918 = vmul.f32 %v903, %v914
      %s919 = scalar_lea.vmem %s1, 160
      %v920 = vld [vmem:[%s919] sm:$0xff]
      %v921 = vld [vmem:[%s919 + $0x8] sm:$0xff]
      %v922 = vld [vmem:[%s919 + $0x10] sm:$0xff]
      %v923 = vld [vmem:[%s919 + $0x18] sm:$0xff]
      %v925 = vsel %vm257, %v920, 0
      %v928 = vsel %vm257, %v921, 0
      %v931 = vsel %vm257, %v922, 0
      %v934 = vsel %vm257, %v923, 0
      %v937 = vsel %vm270, %v917, 0
      %v940 = vsel %vm270, %v918, 0
      %942 = vmatprep.subr.mxu0 %v940
      %943 = vmatpush1.msra.mxu0 %v937
      %944 = vmatprep.subr.mxu0 0.0
      %945 = vmatpush1.msra.mxu0 0.0
      %946 = vmatprep.subr.mxu0 0.0
      %947 = vmatpush1.msra.mxu0 0.0
      %948 = vmatprep.subr.mxu0 0.0
      %949 = vmatpush1.msra.mxu0 0.0
      %950 = vmatprep.subr.mxu0 0.0
      %951 = vmatpush1.msra.mxu0 0.0
      %952 = vmatprep.subr.mxu0 0.0
      %953 = vmatpush1.msra.mxu0 0.0
      %954 = vmatprep.subr.mxu0 0.0
      %955 = vmatpush1.msra.mxu0 0.0
      %956 = vmatprep.subr.mxu0 0.0
      %957 = vmatpush1.msra.mxu0 0.0
      %958 = vmatprep.subr.mxu0 0.0
      %959 = vmatpush1.msra.mxu0 0.0
      %960 = vmatprep.subr.mxu0 0.0
      %961 = vmatpush1.msra.mxu0 0.0
      %962 = vmatprep.subr.mxu0 0.0
      %963 = vmatpush1.msra.mxu0 0.0
      %964 = vmatprep.subr.mxu0 0.0
      %965 = vmatpush1.msra.mxu0 0.0
      %966 = vmatprep.subr.mxu0 0.0
      %967 = vmatpush1.msra.mxu0 0.0
      %968 = vmatprep.subr.mxu0 0.0
      %969 = vmatpush1.msra.mxu0 0.0
      %970 = vmatprep.subr.mxu0 0.0
      %971 = vmatpush1.msra.mxu0 0.0
      %972 = vmatprep.subr.mxu0 0.0
      %973 = vmatpush1.msra.mxu0 0.0
      %974 = vmatprep.subr.mxu0 0.0
      %975 = vmatpush1.msra.mxu0 0.0
      %976 = vmatprep.subr.mxu0 0.0
      %977 = vmatpush1.msra.mxu0 0.0
      %978 = vmatprep.subr.mxu0 0.0
      %979 = vmatpush1.msra.mxu0 0.0
      %980 = vmatprep.subr.mxu0 0.0
      %981 = vmatpush1.msra.mxu0 0.0
      %982 = vmatprep.subr.mxu0 0.0
      %983 = vmatpush1.msra.mxu0 0.0
      %984 = vmatprep.subr.mxu0 0.0
      %985 = vmatpush1.msra.mxu0 0.0
      %986 = vmatprep.subr.mxu0 0.0
      %987 = vmatpush1.msra.mxu0 0.0
      %988 = vmatprep.subr.mxu0 0.0
      %989 = vmatpush1.msra.mxu0 0.0
      %990 = vmatprep.subr.mxu0 0.0
      %991 = vmatpush1.msra.mxu0 0.0
      %992 = vmatprep.subr.mxu0 0.0
      %993 = vmatpush1.msra.mxu0 0.0
      %994 = vmatprep.subr.mxu0 0.0
      %995 = vmatpush1.msra.mxu0 0.0
      %996 = vmatprep.subr.mxu0 0.0
      %997 = vmatpush1.msra.mxu0 0.0
      %998 = vmatprep.subr.mxu0 0.0
      %999 = vmatpush1.msra.mxu0 0.0
      %1000 = vmatprep.subr.mxu0 0.0
      %1001 = vmatpush1.msra.mxu0 0.0
      %1002 = vmatprep.subr.mxu0 0.0
      %1003 = vmatpush1.msra.mxu0 0.0
      %1004 = vmatprep.subr.mxu0 0.0
      %1005 = vmatpush1.msra.mxu0 0.0
      %1006 = vmatprep.mubr.f32.mxu0 0.0
      %1007 = vmatmul.mubr.f32.gmra.mrb[0].mxu0 %v925
      %v1008 = vpop.f32.mrb[0].mxu0
      %v1009 = vadd.f32 0.0, %v1008
      %v1010 = vpop.f32.mrb[0].mxu0
      %v1011 = vadd.f32 0.0, %v1010
      %1012 = vmatprep.mubr.f32.mxu0 0.0
      %1013 = vmatmul.mubr.f32.gmra.mrb[0].mxu0 %v928
      %v1014 = vpop.f32.mrb[0].mxu0
      %v1015 = vadd.f32 0.0, %v1014
      %v1016 = vpop.f32.mrb[0].mxu0
      %v1017 = vadd.f32 0.0, %v1016
      %1018 = vmatprep.mubr.f32.mxu0 0.0
      %1019 = vmatmul.mubr.f32.gmra.mrb[0].mxu0 %v931
      %v1020 = vpop.f32.mrb[0].mxu0
      %v1021 = vadd.f32 0.0, %v1020
      %v1022 = vpop.f32.mrb[0].mxu0
      %v1023 = vadd.f32 0.0, %v1022
      %1024 = vmatprep.mubr.f32.mxu0 0.0
      %1025 = vmatmul.mubr.f32.gmra.mrb[0].mxu0 %v934
      %v1026 = vpop.f32.mrb[0].mxu0
      %v1027 = vadd.f32 0.0, %v1026
      %v1028 = vpop.f32.mrb[0].mxu0
      %v1029 = vadd.f32 0.0, %v1028
      %1030 = vdwg.mxu0
      %v1031 = vadd.f32 %v887, %v1009
      %v1032 = vadd.f32 %v888, %v1011
      %v1033 = vadd.f32 %v889, %v1015
      %v1034 = vadd.f32 %v890, %v1017
      %v1035 = vadd.f32 %v891, %v1021
      %v1036 = vadd.f32 %v892, %v1023
      %v1037 = vadd.f32 %v893, %v1027
      %v1038 = vadd.f32 %v894, %v1029
      %1039 = vrot.lane.b32.xlu0 %v198, 113
      %v1040 = vpop.permute.xlu0 %1039
      %1041 = vrot.lane.b32.xlu0 %v200, 113
      %v1042 = vpop.permute.xlu0 %1041
      %vm1043 = vcmask 924672
      %v1044 = vsel %vm1043, %v1040, %v1042
      %v1047 = vsel %vm1043, %v1042, 0.0
      %s1048 = scalar_lea.vmem %s2, 12
      %v1049 = vld [vmem:[%s1048] sm:$0x3]
      %v1051 = vlaneseq
      %v1052 = vshrl.u32 %v1051, 7
      %v1053 = vsub.s32 0, %v1052
      %v1054 = vrot.slane %v1049, %v1053
      %v1055 = vlaneseq
      %v1056 = vshrl.u32 %v1055, 7
      %v1057 = vsub.s32 1, %v1056
      %v1058 = vrot.slane %v1049, %v1057
      %v1061 = vmul.f32 %v1044, %v1054
      %v1062 = vmul.f32 %v1047, %v1058
      %s1063 = scalar_lea.vmem %s1, 192
      %v1064 = vld [vmem:[%s1063] sm:$0xff]
      %v1065 = vld [vmem:[%s1063 + $0x8] sm:$0xff]
      %v1066 = vld [vmem:[%s1063 + $0x10] sm:$0xff]
      %v1067 = vld [vmem:[%s1063 + $0x18] sm:$0xff]
      %v1069 = vsel %vm257, %v1064, 0
      %v1072 = vsel %vm257, %v1065, 0
      %v1075 = vsel %vm257, %v1066, 0
      %v1078 = vsel %vm257, %v1067, 0
      %v1081 = vsel %vm270, %v1061, 0
      %v1084 = vsel %vm270, %v1062, 0
      %1086 = vmatprep.subr.mxu0 %v1084
      %1087 = vmatpush1.msra.mxu0 %v1081
      %1088 = vmatprep.subr.mxu0 0.0
      %1089 = vmatpush1.msra.mxu0 0.0
      %1090 = vmatprep.subr.mxu0 0.0
      %1091 = vmatpush1.msra.mxu0 0.0
      %1092 = vmatprep.subr.mxu0 0.0
      %1093 = vmatpush1.msra.mxu0 0.0
      %1094 = vmatprep.subr.mxu0 0.0
      %1095 = vmatpush1.msra.mxu0 0.0
      %1096 = vmatprep.subr.mxu0 0.0
      %1097 = vmatpush1.msra.mxu0 0.0
      %1098 = vmatprep.subr.mxu0 0.0
      %1099 = vmatpush1.msra.mxu0 0.0
      %1100 = vmatprep.subr.mxu0 0.0
      %1101 = vmatpush1.msra.mxu0 0.0
      %1102 = vmatprep.subr.mxu0 0.0
      %1103 = vmatpush1.msra.mxu0 0.0
      %1104 = vmatprep.subr.mxu0 0.0
      %1105 = vmatpush1.msra.mxu0 0.0
      %1106 = vmatprep.subr.mxu0 0.0
      %1107 = vmatpush1.msra.mxu0 0.0
      %1108 = vmatprep.subr.mxu0 0.0
      %1109 = vmatpush1.msra.mxu0 0.0
      %1110 = vmatprep.subr.mxu0 0.0
      %1111 = vmatpush1.msra.mxu0 0.0
      %1112 = vmatprep.subr.mxu0 0.0
      %1113 = vmatpush1.msra.mxu0 0.0
      %1114 = vmatprep.subr.mxu0 0.0
      %1115 = vmatpush1.msra.mxu0 0.0
      %1116 = vmatprep.subr.mxu0 0.0
      %1117 = vmatpush1.msra.mxu0 0.0
      %1118 = vmatprep.subr.mxu0 0.0
      %1119 = vmatpush1.msra.mxu0 0.0
      %1120 = vmatprep.subr.mxu0 0.0
      %1121 = vmatpush1.msra.mxu0 0.0
      %1122 = vmatprep.subr.mxu0 0.0
      %1123 = vmatpush1.msra.mxu0 0.0
      %1124 = vmatprep.subr.mxu0 0.0
      %1125 = vmatpush1.msra.mxu0 0.0
      %1126 = vmatprep.subr.mxu0 0.0
      %1127 = vmatpush1.msra.mxu0 0.0
      %1128 = vmatprep.subr.mxu0 0.0
      %1129 = vmatpush1.msra.mxu0 0.0
      %1130 = vmatprep.subr.mxu0 0.0
      %1131 = vmatpush1.msra.mxu0 0.0
      %1132 = vmatprep.subr.mxu0 0.0
      %1133 = vmatpush1.msra.mxu0 0.0
      %1134 = vmatprep.subr.mxu0 0.0
      %1135 = vmatpush1.msra.mxu0 0.0
      %1136 = vmatprep.subr.mxu0 0.0
      %1137 = vmatpush1.msra.mxu0 0.0
      %1138 = vmatprep.subr.mxu0 0.0
      %1139 = vmatpush1.msra.mxu0 0.0
      %1140 = vmatprep.subr.mxu0 0.0
      %1141 = vmatpush1.msra.mxu0 0.0
      %1142 = vmatprep.subr.mxu0 0.0
      %1143 = vmatpush1.msra.mxu0 0.0
      %1144 = vmatprep.subr.mxu0 0.0
      %1145 = vmatpush1.msra.mxu0 0.0
      %1146 = vmatprep.subr.mxu0 0.0
      %1147 = vmatpush1.msra.mxu0 0.0
      %1148 = vmatprep.subr.mxu0 0.0
      %1149 = vmatpush1.msra.mxu0 0.0
      %1150 = vmatprep.mubr.f32.mxu0 0.0
      %1151 = vmatmul.mubr.f32.gmra.mrb[0].mxu0 %v1069
      %v1152 = vpop.f32.mrb[0].mxu0
      %v1153 = vadd.f32 0.0, %v1152
      %v1154 = vpop.f32.mrb[0].mxu0
      %v1155 = vadd.f32 0.0, %v1154
      %1156 = vmatprep.mubr.f32.mxu0 0.0
      %1157 = vmatmul.mubr.f32.gmra.mrb[0].mxu0 %v1072
      %v1158 = vpop.f32.mrb[0].mxu0
      %v1159 = vadd.f32 0.0, %v1158
      %v1160 = vpop.f32.mrb[0].mxu0
      %v1161 = vadd.f32 0.0, %v1160
      %1162 = vmatprep.mubr.f32.mxu0 0.0
      %1163 = vmatmul.mubr.f32.gmra.mrb[0].mxu0 %v1075
      %v1164 = vpop.f32.mrb[0].mxu0
      %v1165 = vadd.f32 0.0, %v1164
      %v1166 = vpop.f32.mrb[0].mxu0
      %v1167 = vadd.f32 0.0, %v1166
      %1168 = vmatprep.mubr.f32.mxu0 0.0
      %1169 = vmatmul.mubr.f32.gmra.mrb[0].mxu0 %v1078
      %v1170 = vpop.f32.mrb[0].mxu0
      %v1171 = vadd.f32 0.0, %v1170
      %v1172 = vpop.f32.mrb[0].mxu0
      %v1173 = vadd.f32 0.0, %v1172
      %1174 = vdwg.mxu0
      %v1175 = vadd.f32 %v1031, %v1153
      %v1176 = vadd.f32 %v1032, %v1155
      %v1177 = vadd.f32 %v1033, %v1159
      %v1178 = vadd.f32 %v1034, %v1161
      %v1179 = vadd.f32 %v1035, %v1165
      %v1180 = vadd.f32 %v1036, %v1167
      %v1181 = vadd.f32 %v1037, %v1171
      %v1182 = vadd.f32 %v1038, %v1173
      %1183 = vrot.lane.b32.xlu0 %v198, 112
      %v1184 = vpop.permute.xlu0 %1183
      %1185 = vrot.lane.b32.xlu0 %v200, 112
      %v1186 = vpop.permute.xlu0 %1185
      %vm1187 = vcmask 916480
      %v1188 = vsel %vm1187, %v1184, %v1186
      %v1191 = vsel %vm1187, %v1186, 0.0
      %s1192 = scalar_lea.vmem %s2, 14
      %v1193 = vld [vmem:[%s1192] sm:$0x3]
      %v1195 = vlaneseq
      %v1196 = vshrl.u32 %v1195, 7
      %v1197 = vsub.s32 0, %v1196
      %v1198 = vrot.slane %v1193, %v1197
      %v1199 = vlaneseq
      %v1200 = vshrl.u32 %v1199, 7
      %v1201 = vsub.s32 1, %v1200
      %v1202 = vrot.slane %v1193, %v1201
      %v1205 = vmul.f32 %v1188, %v1198
      %v1206 = vmul.f32 %v1191, %v1202
      %s1207 = scalar_lea.vmem %s1, 224
      %v1208 = vld [vmem:[%s1207] sm:$0xff]
      %v1209 = vld [vmem:[%s1207 + $0x8] sm:$0xff]
      %v1210 = vld [vmem:[%s1207 + $0x10] sm:$0xff]
      %v1211 = vld [vmem:[%s1207 + $0x18] sm:$0xff]
      %v1213 = vsel %vm257, %v1208, 0
      %v1216 = vsel %vm257, %v1209, 0
      %v1219 = vsel %vm257, %v1210, 0
      %v1222 = vsel %vm257, %v1211, 0
      %v1225 = vsel %vm270, %v1205, 0
      %v1228 = vsel %vm270, %v1206, 0
      %1230 = vmatprep.subr.mxu0 %v1228
      %1231 = vmatpush1.msra.mxu0 %v1225
      %1232 = vmatprep.subr.mxu0 0.0
      %1233 = vmatpush1.msra.mxu0 0.0
      %1234 = vmatprep.subr.mxu0 0.0
      %1235 = vmatpush1.msra.mxu0 0.0
      %1236 = vmatprep.subr.mxu0 0.0
      %1237 = vmatpush1.msra.mxu0 0.0
      %1238 = vmatprep.subr.mxu0 0.0
      %1239 = vmatpush1.msra.mxu0 0.0
      %1240 = vmatprep.subr.mxu0 0.0
      %1241 = vmatpush1.msra.mxu0 0.0
      %1242 = vmatprep.subr.mxu0 0.0
      %1243 = vmatpush1.msra.mxu0 0.0
      %1244 = vmatprep.subr.mxu0 0.0
      %1245 = vmatpush1.msra.mxu0 0.0
      %1246 = vmatprep.subr.mxu0 0.0
      %1247 = vmatpush1.msra.mxu0 0.0
      %1248 = vmatprep.subr.mxu0 0.0
      %1249 = vmatpush1.msra.mxu0 0.0
      %1250 = vmatprep.subr.mxu0 0.0
      %1251 = vmatpush1.msra.mxu0 0.0
      %1252 = vmatprep.subr.mxu0 0.0
      %1253 = vmatpush1.msra.mxu0 0.0
      %1254 = vmatprep.subr.mxu0 0.0
      %1255 = vmatpush1.msra.mxu0 0.0
      %1256 = vmatprep.subr.mxu0 0.0
      %1257 = vmatpush1.msra.mxu0 0.0
      %1258 = vmatprep.subr.mxu0 0.0
      %1259 = vmatpush1.msra.mxu0 0.0
      %1260 = vmatprep.subr.mxu0 0.0
      %1261 = vmatpush1.msra.mxu0 0.0
      %1262 = vmatprep.subr.mxu0 0.0
      %1263 = vmatpush1.msra.mxu0 0.0
      %1264 = vmatprep.subr.mxu0 0.0
      %1265 = vmatpush1.msra.mxu0 0.0
      %1266 = vmatprep.subr.mxu0 0.0
      %1267 = vmatpush1.msra.mxu0 0.0
      %1268 = vmatprep.subr.mxu0 0.0
      %1269 = vmatpush1.msra.mxu0 0.0
      %1270 = vmatprep.subr.mxu0 0.0
      %1271 = vmatpush1.msra.mxu0 0.0
      %1272 = vmatprep.subr.mxu0 0.0
      %1273 = vmatpush1.msra.mxu0 0.0
      %1274 = vmatprep.subr.mxu0 0.0
      %1275 = vmatpush1.msra.mxu0 0.0
      %1276 = vmatprep.subr.mxu0 0.0
      %1277 = vmatpush1.msra.mxu0 0.0
      %1278 = vmatprep.subr.mxu0 0.0
      %1279 = vmatpush1.msra.mxu0 0.0
      %1280 = vmatprep.subr.mxu0 0.0
      %1281 = vmatpush1.msra.mxu0 0.0
      %1282 = vmatprep.subr.mxu0 0.0
      %1283 = vmatpush1.msra.mxu0 0.0
      %1284 = vmatprep.subr.mxu0 0.0
      %1285 = vmatpush1.msra.mxu0 0.0
      %1286 = vmatprep.subr.mxu0 0.0
      %1287 = vmatpush1.msra.mxu0 0.0
      %1288 = vmatprep.subr.mxu0 0.0
      %1289 = vmatpush1.msra.mxu0 0.0
      %1290 = vmatprep.subr.mxu0 0.0
      %1291 = vmatpush1.msra.mxu0 0.0
      %1292 = vmatprep.subr.mxu0 0.0
      %1293 = vmatpush1.msra.mxu0 0.0
      %1294 = vmatprep.mubr.f32.mxu0 0.0
      %1295 = vmatmul.mubr.f32.gmra.mrb[0].mxu0 %v1213
      %v1296 = vpop.f32.mrb[0].mxu0
      %v1297 = vadd.f32 0.0, %v1296
      %v1298 = vpop.f32.mrb[0].mxu0
      %v1299 = vadd.f32 0.0, %v1298
      %1300 = vmatprep.mubr.f32.mxu0 0.0
      %1301 = vmatmul.mubr.f32.gmra.mrb[0].mxu0 %v1216
      %v1302 = vpop.f32.mrb[0].mxu0
      %v1303 = vadd.f32 0.0, %v1302
      %v1304 = vpop.f32.mrb[0].mxu0
      %v1305 = vadd.f32 0.0, %v1304
      %1306 = vmatprep.mubr.f32.mxu0 0.0
      %1307 = vmatmul.mubr.f32.gmra.mrb[0].mxu0 %v1219
      %v1308 = vpop.f32.mrb[0].mxu0
      %v1309 = vadd.f32 0.0, %v1308
      %v1310 = vpop.f32.mrb[0].mxu0
      %v1311 = vadd.f32 0.0, %v1310
      %1312 = vmatprep.mubr.f32.mxu0 0.0
      %1313 = vmatmul.mubr.f32.gmra.mrb[0].mxu0 %v1222
      %v1314 = vpop.f32.mrb[0].mxu0
      %v1315 = vadd.f32 0.0, %v1314
      %v1316 = vpop.f32.mrb[0].mxu0
      %v1317 = vadd.f32 0.0, %v1316
      %1318 = vdwg.mxu0
      %v1319 = vadd.f32 %v1175, %v1297
      %v1320 = vadd.f32 %v1176, %v1299
      %v1321 = vadd.f32 %v1177, %v1303
      %v1322 = vadd.f32 %v1178, %v1305
      %v1323 = vadd.f32 %v1179, %v1309
      %v1324 = vadd.f32 %v1180, %v1311
      %v1325 = vadd.f32 %v1181, %v1315
      %v1326 = vadd.f32 %v1182, %v1317
      %1327 = vrot.lane.b32.xlu0 %v198, 111
      %v1328 = vpop.permute.xlu0 %1327
      %1329 = vrot.lane.b32.xlu0 %v200, 111
      %v1330 = vpop.permute.xlu0 %1329
      %vm1331 = vcmask 908288
      %v1332 = vsel %vm1331, %v1328, %v1330
      %v1335 = vsel %vm1331, %v1330, 0.0
      %s1336 = scalar_lea.vmem %s2, 16
      %v1337 = vld [vmem:[%s1336] sm:$0x3]
      %v1339 = vlaneseq
      %v1340 = vshrl.u32 %v1339, 7
      %v1341 = vsub.s32 0, %v1340
      %v1342 = vrot.slane %v1337, %v1341
      %v1343 = vlaneseq
      %v1344 = vshrl.u32 %v1343, 7
      %v1345 = vsub.s32 1, %v1344
      %v1346 = vrot.slane %v1337, %v1345
      %v1349 = vmul.f32 %v1332, %v1342
      %v1350 = vmul.f32 %v1335, %v1346
      %s1351 = scalar_lea.vmem %s1, 256
      %v1352 = vld [vmem:[%s1351] sm:$0xff]
      %v1353 = vld [vmem:[%s1351 + $0x8] sm:$0xff]
      %v1354 = vld [vmem:[%s1351 + $0x10] sm:$0xff]
      %v1355 = vld [vmem:[%s1351 + $0x18] sm:$0xff]
      %v1357 = vsel %vm257, %v1352, 0
      %v1360 = vsel %vm257, %v1353, 0
      %v1363 = vsel %vm257, %v1354, 0
      %v1366 = vsel %vm257, %v1355, 0
      %v1369 = vsel %vm270, %v1349, 0
      %v1372 = vsel %vm270, %v1350, 0
      %1374 = vmatprep.subr.mxu0 %v1372
      %1375 = vmatpush1.msra.mxu0 %v1369
      %1376 = vmatprep.subr.mxu0 0.0
      %1377 = vmatpush1.msra.mxu0 0.0
      %1378 = vmatprep.subr.mxu0 0.0
      %1379 = vmatpush1.msra.mxu0 0.0
      %1380 = vmatprep.subr.mxu0 0.0
      %1381 = vmatpush1.msra.mxu0 0.0
      %1382 = vmatprep.subr.mxu0 0.0
      %1383 = vmatpush1.msra.mxu0 0.0
      %1384 = vmatprep.subr.mxu0 0.0
      %1385 = vmatpush1.msra.mxu0 0.0
      %1386 = vmatprep.subr.mxu0 0.0
      %1387 = vmatpush1.msra.mxu0 0.0
      %1388 = vmatprep.subr.mxu0 0.0
      %1389 = vmatpush1.msra.mxu0 0.0
      %1390 = vmatprep.subr.mxu0 0.0
      %1391 = vmatpush1.msra.mxu0 0.0
      %1392 = vmatprep.subr.mxu0 0.0
      %1393 = vmatpush1.msra.mxu0 0.0
      %1394 = vmatprep.subr.mxu0 0.0
      %1395 = vmatpush1.msra.mxu0 0.0
      %1396 = vmatprep.subr.mxu0 0.0
      %1397 = vmatpush1.msra.mxu0 0.0
      %1398 = vmatprep.subr.mxu0 0.0
      %1399 = vmatpush1.msra.mxu0 0.0
      %1400 = vmatprep.subr.mxu0 0.0
      %1401 = vmatpush1.msra.mxu0 0.0
      %1402 = vmatprep.subr.mxu0 0.0
      %1403 = vmatpush1.msra.mxu0 0.0
      %1404 = vmatprep.subr.mxu0 0.0
      %1405 = vmatpush1.msra.mxu0 0.0
      %1406 = vmatprep.subr.mxu0 0.0
      %1407 = vmatpush1.msra.mxu0 0.0
      %1408 = vmatprep.subr.mxu0 0.0
      %1409 = vmatpush1.msra.mxu0 0.0
      %1410 = vmatprep.subr.mxu0 0.0
      %1411 = vmatpush1.msra.mxu0 0.0
      %1412 = vmatprep.subr.mxu0 0.0
      %1413 = vmatpush1.msra.mxu0 0.0
      %1414 = vmatprep.subr.mxu0 0.0
      %1415 = vmatpush1.msra.mxu0 0.0
      %1416 = vmatprep.subr.mxu0 0.0
      %1417 = vmatpush1.msra.mxu0 0.0
      %1418 = vmatprep.subr.mxu0 0.0
      %1419 = vmatpush1.msra.mxu0 0.0
      %1420 = vmatprep.subr.mxu0 0.0
      %1421 = vmatpush1.msra.mxu0 0.0
      %1422 = vmatprep.subr.mxu0 0.0
      %1423 = vmatpush1.msra.mxu0 0.0
      %1424 = vmatprep.subr.mxu0 0.0
      %1425 = vmatpush1.msra.mxu0 0.0
      %1426 = vmatprep.subr.mxu0 0.0
      %1427 = vmatpush1.msra.mxu0 0.0
      %1428 = vmatprep.subr.mxu0 0.0
      %1429 = vmatpush1.msra.mxu0 0.0
      %1430 = vmatprep.subr.mxu0 0.0
      %1431 = vmatpush1.msra.mxu0 0.0
      %1432 = vmatprep.subr.mxu0 0.0
      %1433 = vmatpush1.msra.mxu0 0.0
      %1434 = vmatprep.subr.mxu0 0.0
      %1435 = vmatpush1.msra.mxu0 0.0
      %1436 = vmatprep.subr.mxu0 0.0
      %1437 = vmatpush1.msra.mxu0 0.0
      %1438 = vmatprep.mubr.f32.mxu0 0.0
      %1439 = vmatmul.mubr.f32.gmra.mrb[0].mxu0 %v1357
      %v1440 = vpop.f32.mrb[0].mxu0
      %v1441 = vadd.f32 0.0, %v1440
      %v1442 = vpop.f32.mrb[0].mxu0
      %v1443 = vadd.f32 0.0, %v1442
      %1444 = vmatprep.mubr.f32.mxu0 0.0
      %1445 = vmatmul.mubr.f32.gmra.mrb[0].mxu0 %v1360
      %v1446 = vpop.f32.mrb[0].mxu0
      %v1447 = vadd.f32 0.0, %v1446
      %v1448 = vpop.f32.mrb[0].mxu0
      %v1449 = vadd.f32 0.0, %v1448
      %1450 = vmatprep.mubr.f32.mxu0 0.0
      %1451 = vmatmul.mubr.f32.gmra.mrb[0].mxu0 %v1363
      %v1452 = vpop.f32.mrb[0].mxu0
      %v1453 = vadd.f32 0.0, %v1452
      %v1454 = vpop.f32.mrb[0].mxu0
      %v1455 = vadd.f32 0.0, %v1454
      %1456 = vmatprep.mubr.f32.mxu0 0.0
      %1457 = vmatmul.mubr.f32.gmra.mrb[0].mxu0 %v1366
      %v1458 = vpop.f32.mrb[0].mxu0
      %v1459 = vadd.f32 0.0, %v1458
      %v1460 = vpop.f32.mrb[0].mxu0
      %v1461 = vadd.f32 0.0, %v1460
      %1462 = vdwg.mxu0
      %v1463 = vadd.f32 %v1319, %v1441
      %v1464 = vadd.f32 %v1320, %v1443
      %v1465 = vadd.f32 %v1321, %v1447
      %v1466 = vadd.f32 %v1322, %v1449
      %v1467 = vadd.f32 %v1323, %v1453
      %v1468 = vadd.f32 %v1324, %v1455
      %v1469 = vadd.f32 %v1325, %v1459
      %v1470 = vadd.f32 %v1326, %v1461
      %v1471 = vld [vmem:[%s3] sm:$0xff]
      %v1472 = vld [vmem:[%s3 + $0x8] sm:$0xff]
      %v1473 = vld [vmem:[%s3 + $0x10] sm:$0xff]
      %v1474 = vld [vmem:[%s3 + $0x18] sm:$0xff]
      %1476 = vset.pattern.permute.xlu0 0
      %1477 = vperm.xlu0 %1476, %v1471
      %v1478 = vpop.permute.xlu0 %1477
      %1481 = vset.pattern.permute.xlu0 0
      %1482 = vperm.xlu0 %1481, %v1472
      %v1483 = vpop.permute.xlu0 %1482
      %1486 = vset.pattern.permute.xlu0 0
      %1487 = vperm.xlu0 %1486, %v1473
      %v1488 = vpop.permute.xlu0 %1487
      %1491 = vset.pattern.permute.xlu0 0
      %1492 = vperm.xlu0 %1491, %v1474
      %v1493 = vpop.permute.xlu0 %1492
      %v1495 = vadd.f32 %v1463, %v1478
      %v1496 = vadd.f32 %v1464, %v1478
      %v1497 = vadd.f32 %v1465, %v1483
      %v1498 = vadd.f32 %v1466, %v1483
      %v1499 = vadd.f32 %v1467, %v1488
      %v1500 = vadd.f32 %v1468, %v1488
      %v1501 = vadd.f32 %v1469, %v1493
      %v1502 = vadd.f32 %v1470, %v1493
      %1503 = vst [vmem:[%s197] sm:$0xff] %v1495
      %1504 = vst [vmem:[%s197 + $0x8] sm:$0xff] %v1496
      %1505 = vst [vmem:[%s197 + $0x10] sm:$0xff] %v1497
      %1506 = vst [vmem:[%s197 + $0x18] sm:$0xff] %v1498
      %1507 = vst [vmem:[%s197 + $0x20] sm:$0xff] %v1499
      %1508 = vst [vmem:[%s197 + $0x28] sm:$0xff] %v1500
      %1509 = vst [vmem:[%s197 + $0x30] sm:$0xff] %v1501
      %1510 = vst [vmem:[%s197 + $0x38] sm:$0xff] %v1502
      %p1511 = scmp.lt.s32.totalorder %s15, 1
      %s1512 = scalar_select %p1511, %s15, 1
      %s1513 = smul.addr %s1512, 8
      %s1514 = smul.addr %s1513, 8
      %s1515 = scalar_lea.vmem %s4, %s1514
      // Predicated region
      $region37: #{resize_conv.1} parent=35 // pred_check
        %p1516 = pneg %p122
      $region38: #{resize_conv.1} parent=35 // pred_check_branch
        %1518 = sbr.rel (%p1516) target = $region40
      $region39: #{resize_conv.1} parent=35 // pred_region
        _
      $region40: #{resize_conv.1} parent=35 // pred_fallthru
        _
    $region36: #{resize_conv.1} parent=5 // pred_fallthru
      _
    %p1519 = scmp.le.s32.totalorder 2, %s10
    // Predicated region
    $region41: #{resize_conv.1} parent=5 // pred_check
      %p1520 = pneg %p1519
    $region42: #{resize_conv.1} parent=5 // pred_check_branch
      %1522 = sbr.rel (%p1520) target = $region44
    $region43: #{resize_conv.1} parent=5 // pred_region
      %s1523 = ssub.s32 %s10, 2
      // Predicated region
      $region45: #{resize_conv.1} parent=43 // pred_check
        %p1524 = pneg %p128
      $region46: #{resize_conv.1} parent=43 // pred_check_branch
        %1526 = sbr.rel (%p1524) target = $region48
      $region47: #{resize_conv.1} parent=43 // pred_region
        %p1527 = scmp.lt.s32.totalorder %s16, 1
        %s1528 = scalar_select %p1527, %s16, 1
        %s1529 = smul.addr %s1528, 8
        %s1530 = smul.addr %s1529, 8
        %s1531 = scalar_lea.vmem %s4, %s1530
      $region48: #{resize_conv.1} parent=43 // pred_fallthru
        _
    $region44: #{resize_conv.1} parent=5 // pred_fallthru
      _
  $region6: #{resize_conv.1} parent=0 // loop_footer
    %s14 = sadd.s32 1, %s10
  $region7: #{resize_conv.1} parent=0 // loop_footer_branch
    %9 = sbr.rel target = $region3
  $region8: #{resize_conv.1} parent=0 // loop_exit
    _

</llo_original>
